<compile_context>
chip_gen: v5e
topology: v5e:2x2
jax: 0.10.0
libtpu: 0.0.40
codegen_flags: <defaults>
</compile_context>

<pallas_src>
import jax
import jax.numpy as jnp
from jax import lax
from jax.experimental import pallas as pl
from jax.experimental.pallas import tpu as pltpu

LANE = 128  # pad every matmul width to the MXU lane width (saturates v5e; helps v6e/v7x too)


def _round_up(x, m=LANE):
    return ((x + m - 1) // m) * m


def _pad2(a, rows, cols):
    a = jnp.asarray(a, jnp.float32)
    return jnp.pad(a, ((0, rows - a.shape[0]), (0, cols - a.shape[1])))


# ----------------------------------------------------------------------------
# Fused Pallas kernel: GraphConv x k  ->  node gather  ->  Linear head(s)
# ----------------------------------------------------------------------------
def _make_fused_kernel(layer_meta, num_fetch, n_fetch_cols, n_nodes):
    """layer_meta: tuple of ('gcn', weight_first) / ('gather', None) / ('lin', None) /
    ('lin_split', None), in execution order."""

    def kernel(adj_ref, feat_ref, idx_ref, *rest):
        out_ref = rest[-1]
        param_refs = rest[:-1]

        # Single bf16 copy of the adjacency; it feeds every MXU aggregate directly.
        adj_b = adj_ref[...]                                         # (N, N) bf16, exact 0/1
        # in-degrees via an MXU matvec: no f32 NxN copy, no NxN XLU lane-reduce.
        ones_col = jnp.ones((n_nodes, 1), jnp.bfloat16)
        deg = jnp.dot(adj_b, ones_col, preferred_element_type=jnp.float32)   # (N, 1) f32
        norm = lax.rsqrt(jnp.maximum(deg, 1.0))                      # clamp(min=1) ** -0.5

        hs = [feat_ref[...].astype(jnp.float32)]                     # activation part(s)
        pi = 0
        for kind, weight_first in layer_meta:
            if kind == "gcn":
                w = param_refs[pi][...]                              # bf16 (fin_pad, fout_pad)
                b = param_refs[pi + 1][...]                          # f32  (1, fout_pad)
                pi += 2
                hn = (hs[0] * norm).astype(jnp.bfloat16)             # source-side norm
                if weight_first:                                     # in_feats > out_feats
                    z = jnp.dot(hn, w, preferred_element_type=jnp.float32)
                    z = jnp.dot(adj_b, z.astype(jnp.bfloat16),
                                preferred_element_type=jnp.float32)
                else:                                                # aggregate, then matmul
                    z = jnp.dot(adj_b, hn, preferred_element_type=jnp.float32)
                    z = jnp.dot(z.astype(jnp.bfloat16), w,
                                preferred_element_type=jnp.float32)
                hs = [jnp.maximum(z * norm + b, 0.0)]                # dest norm + bias + ReLU
            elif kind == "gather":
                # one broadcast compare per fetch column -> bf16 one-hot -> bf16 MXU gather
                h_b = hs[0].astype(jnp.bfloat16)
                col_id = lax.broadcasted_iota(jnp.int32, (num_fetch, n_nodes), 1)
                hs = []
                for c in range(n_fetch_cols):
                    onehot = (col_id == idx_ref[c]).astype(jnp.bfloat16)     # (num_fetch, N)
                    hs.append(jnp.dot(onehot, h_b, preferred_element_type=jnp.float32))
            elif kind == "lin":
                w = param_refs[pi][...]
                b = param_refs[pi + 1][...]
                pi += 2
                hs = [jnp.dot(hs[0].astype(jnp.bfloat16), w,
                              preferred_element_type=jnp.float32) + b]
            else:  # 'lin_split' -- LinkPred head: sum of two dots, no lane-axis concat
                w0 = param_refs[pi][...]
                w1 = param_refs[pi + 1][...]
                b = param_refs[pi + 2][...]
                pi += 3
                z = jnp.dot(hs[0].astype(jnp.bfloat16), w0,
                            preferred_element_type=jnp.float32)
                z = z + jnp.dot(hs[1].astype(jnp.bfloat16), w1,
                                preferred_element_type=jnp.float32)
                hs = [z + b]

        if len(hs) == 1:
            out_ref[...] = hs[0]
        else:
            # rare config: LinkPred with no Linear after the gather
            out_ref[...] = jnp.concatenate(hs, axis=1)

    return kernel


def fused_forward(adj, features_padded, gather_idx, param_arrays, layer_meta,
                  num_fetch, n_fetch_cols, out_rows, out_pad):
    n = adj.shape[0]
    f_pad = features_padded.shape[1]
    kernel = _make_fused_kernel(tuple(layer_meta), num_fetch, n_fetch_cols, n)

    # explicit VMEM budget (single-buffered adj/feat + params + generous activation headroom)
    param_bytes = sum(int(a.size) * a.dtype.itemsize for a in param_arrays)
    max_dim = max([f_pad] + [int(a.shape[-1]) for a in param_arrays])
    budget = ((n * n * 2) * 2 + (n * f_pad * 2) * 2 + param_bytes * 2
              + out_rows * out_pad * 4 * 2 + 8 * n * max_dim * 4 + (8 << 20))
    try:
        vmem_cap = int(pltpu.get_tpu_info().vmem_capacity_bytes)
    except Exception:
        vmem_cap = 64 * 1024 * 1024
    vmem_limit = int(min(max(budget, 32 * 1024 * 1024), vmem_cap - (2 << 20)))

    def run(single_buffer_big_inputs):
        def spec(shape, big):
            idx_map = lambda i: (0,) * len(shape)
            if big and single_buffer_big_inputs:
                # grid=(1,): nothing to double-buffer against -> keep one VMEM buffer
                return pl.BlockSpec(shape, idx_map, pipeline_mode=pl.Buffered(1))
            return pl.BlockSpec(shape, idx_map)

        in_specs = [spec((n, n), True), spec((n, f_pad), True),
                    spec(gather_idx.shape, False)]
        in_specs += [spec(a.shape, False) for a in param_arrays]

        grid_spec = pltpu.PrefetchScalarGridSpec(
            num_scalar_prefetch=0,
            grid=(1,),
            in_specs=in_specs,
            out_specs=pl.BlockSpec((out_rows, out_pad), lambda i: (0, 0)),
        )
        return pl.pallas_call(
            kernel,
            out_shape=jax.ShapeDtypeStruct((out_rows, out_pad), jnp.float32),
            grid_spec=grid_spec,
            compiler_params=pltpu.CompilerParams(
                dimension_semantics=("arbitrary",),
                vmem_limit_bytes=vmem_limit),
        )(adj.astype(jnp.bfloat16),          # 0/1 adjacency -> lossless bf16, halves HBM bytes
          features_padded,
          gather_idx,
          *param_arrays)

    try:
        return run(True)
    except Exception:
        # pl.Buffered(1) not supported by this jax/libtpu -> default double-buffering
        return run(False)


# ----------------------------------------------------------------------------
# Classifier (parameter setup + tiny glue in plain JAX; hot path fused in Pallas)
# ----------------------------------------------------------------------------
class Classifier:
    def __init__(self, config, key):
        self.config = config
        self.LinkPred_mode = config[-1][0] == "LinkPred"
        self.vars = []
        self.num_gcn = sum(1 for name, _ in config if name == "GraphConv")
        for name, param in config:
            if name == "Linear":
                key, k = jax.random.split(key)
                fin = param[0] * 2 if self.LinkPred_mode else param[0]
                fout = param[1]
                # kaiming_normal_ (fan_in mode): std = sqrt(2 / fan_in), torch layout (out, in)
                w = jax.random.normal(k, (fout, fin), jnp.float32) * jnp.sqrt(2.0 / fin)
                self.vars.append(w)
                self.vars.append(jnp.zeros((fout,), jnp.float32))
            if name == "GraphConv":
                key, k = jax.random.split(key)
                fin, fout = param[0], param[1]
                # xavier_uniform_: limit = sqrt(6 / (fan_in + fan_out))
                limit = jnp.sqrt(6.0 / (fin + fout))
                w = jax.random.uniform(k, (fin, fout), jnp.float32, -limit, limit)
                self.vars.append(w)
                self.vars.append(jnp.zeros((fout,), jnp.float32))
            # TODO(synk): 'Attention' branch references h_graphlets (undefined in the
            # reference forward); not reachable with the GraphConv/Linear configs used here.

    def forward(self, adj, batch_num_nodes, to_fetch, features, vars=None):
        if vars is None:
            vars = self.vars
        n_nodes, f_in = features.shape
        f_pad = _round_up(f_in)

        # gather indices -> (n_fetch_cols, num_fetch, 1) int32 VMEM input for the kernel
        temp = jnp.concatenate(
            [jnp.zeros((1,), jnp.int32), batch_num_nodes.astype(jnp.int32)])
        offset = jnp.cumsum(temp)[:-1]
        to_fetch = to_fetch.astype(jnp.int32)
        num_fetch = int(to_fetch.shape[0])
        if self.LinkPred_mode:
            n_fetch_cols = 2
            gather_idx = jnp.stack(
                [to_fetch[:, 0] + offset, to_fetch[:, 1] + offset], axis=0)
        else:
            n_fetch_cols = 1
            gather_idx = (to_fetch + offset)[None, :]
        gather_idx = gather_idx.reshape(n_fetch_cols, num_fetch, 1).astype(jnp.int32)

        # flatten config -> static layer metadata + 128-padded, MXU-ready parameter arrays
        layer_meta = []
        arrays = []
        idx = 0
        seen_gcn = 0
        cur_pad = f_pad            # padded width of the activations flowing into next layer
        true_dim = f_in            # un-padded width of the current activations
        split_pending = False      # LinkPred: next Linear consumes two gathered parts
        for name, param in self.config:
            if name == "GraphConv":
                w, b = vars[idx], vars[idx + 1]
                idx += 2
                fin, fout = param[0], param[1]
                fout_pad = _round_up(fout)
                arrays.append(_pad2(w, cur_pad, fout_pad).astype(jnp.bfloat16))     # (fin_pad, fout_pad)
                arrays.append(_pad2(b.reshape(1, -1), 1, fout_pad))                 # f32 (1, fout_pad)
                layer_meta.append(("gcn", fin > fout))
                cur_pad, true_dim = fout_pad, fout
                seen_gcn += 1
                if seen_gcn == self.num_gcn:
                    layer_meta.append(("gather", None))
                    split_pending = self.LinkPred_mode
            elif name == "Linear":
                w, b = vars[idx], vars[idx + 1]
                idx += 2
                fout = param[1]
                fout_pad = _round_up(fout)
                if split_pending:
                    fin = param[0]                       # per-part width (= last GCN fout)
                    wt = w.T                             # (2*fin, fout)
                    arrays.append(_pad2(wt[:fin], cur_pad, fout_pad).astype(jnp.bfloat16))
                    arrays.append(_pad2(wt[fin:], cur_pad, fout_pad).astype(jnp.bfloat16))
                    arrays.append(_pad2(b.reshape(1, -1), 1, fout_pad))
                    layer_meta.append(("lin_split", None))
                    split_pending = False
                else:
                    arrays.append(_pad2(w.T, cur_pad, fout_pad).astype(jnp.bfloat16))
                    arrays.append(_pad2(b.reshape(1, -1), 1, fout_pad))
                    layer_meta.append(("lin", None))
                cur_pad, true_dim = fout_pad, fout
            # 'LinkPred' carries no runnable layer; 'Attention' not supported (see __init__)

        ends_with_parts = split_pending                  # LinkPred config without Linear head
        out_rows = num_fetch if self.num_gcn > 0 else n_nodes
        out_pad = 2 * cur_pad if ends_with_parts else cur_pad

        features_padded = jnp.pad(
            features.astype(jnp.float32), ((0, 0), (0, f_pad - f_in))).astype(jnp.bfloat16)

        # TODO(synk): adj is assumed 0/1 (G-Meta batched graphs); a weighted adjacency would
        # need an f32 path to keep degrees/aggregation exact.
        full = fused_forward(adj, features_padded, gather_idx, arrays, layer_meta,
                             num_fetch, n_fetch_cols, out_rows, out_pad)
        if ends_with_parts:
            h = jnp.concatenate(
                [full[:, :true_dim], full[:, cur_pad:cur_pad + true_dim]], axis=1)
        else:
            h = full[:, :true_dim]
        return h, h


# ----------------------------------------------------------------------------
# Pure-JAX f32 reference (torch semantics) for correctness check
# ----------------------------------------------------------------------------
def _ref_forward(config, vars, link_pred, adj, batch_num_nodes, to_fetch, features):
    h = features.astype(jnp.float32)
    num_gcn = sum(1 for name, _ in config if name == "GraphConv")
    idx, idx_gcn = 0, 0
    for name, param in config:
        if name == "GraphConv":
            w, b = vars[idx], vars[idx + 1]
            deg = jnp.sum(adj, axis=1, keepdims=True)
            norm = jnp.power(jnp.maximum(deg, 1.0), -0.5)
            hn = h * norm
            if param[0] > param[1]:
                z = adj @ (hn @ w)
            else:
                z = (adj @ hn) @ w
            h = jnp.maximum(z * norm + b, 0.0)
            idx += 2
            idx_gcn += 1
            if idx_gcn == num_gcn:
                temp = jnp.concatenate(
                    [jnp.zeros((1,), jnp.int32), batch_num_nodes.astype(jnp.int32)])
                offset = jnp.cumsum(temp)[:-1]
                if link_pred:
                    h1 = h[to_fetch[:, 0] + offset]
                    h2 = h[to_fetch[:, 1] + offset]
                    h = jnp.concatenate((h1, h2), axis=1)
                else:
                    h = h[to_fetch + offset]
        if name == "Linear":
            w, b = vars[idx], vars[idx + 1]
            h = h @ w.T + b
            idx += 2
    return h


# ----------------------------------------------------------------------------
if __name__ == "__main__":
    key = jax.random.PRNGKey(0)

    # small shapes: 2 graphs x 8 nodes, 64 input feats, 32 hidden, 8 classes
    num_graphs, nodes_per_graph = 2, 8
    n_nodes = num_graphs * nodes_per_graph
    in_feats, hidden, n_classes = 64, 32, 8

    key, k_adj, k_feat = jax.random.split(key, 3)

    # block-diagonal adjacency (batched graph), self-loops removed
    blocks = []
    ka = k_adj
    for _ in range(num_graphs):
        ka, kb = jax.random.split(ka)
        blk = jax.random.bernoulli(kb, 0.4, (nodes_per_graph, nodes_per_graph))
        blk = blk.astype(jnp.float32) * (1.0 - jnp.eye(nodes_per_graph, dtype=jnp.float32))
        blocks.append(blk)
    adj = jax.scipy.linalg.block_diag(*blocks).astype(jnp.float32)   # (16, 16)

    features = jax.random.normal(k_feat, (n_nodes, in_feats), jnp.float32)
    batch_num_nodes = jnp.array([nodes_per_graph] * num_graphs, jnp.int32)

    # ---- node-classification mode (exercises both GraphConv orderings) ----
    config = [
        ("GraphConv", [in_feats, hidden]),   # 64 > 32 -> weight-first branch
        ("GraphConv", [hidden, hidden]),     # aggregate-first branch
        ("Linear", [hidden, n_classes]),
    ]
    key, k_init = jax.random.split(key)
    clf = Classifier(config, k_init)
    to_fetch = jnp.array([0, 0], jnp.int32)  # root node of each graph

    out, _ = clf.forward(adj, batch_num_nodes, to_fetch, features)
    out = jax.block_until_ready(out)
    ref = _ref_forward(config, clf.vars, False, adj, batch_num_nodes, to_fetch, features)
    assert out.shape == (num_graphs, n_classes)
    assert jnp.allclose(out, ref, atol=5e-2, rtol=5e-2), \
        "node-classification mismatch vs pure-JAX reference"

    # ---- link-prediction mode (pairs of nodes, split Linear head) ----
    config_lp = [
        ("GraphConv", [in_feats, hidden]),
        ("GraphConv", [hidden, hidden]),
        ("Linear", [hidden, n_classes]),
        ("LinkPred", [True]),
    ]
    key, k_init_lp = jax.random.split(key)
    clf_lp = Classifier(config_lp, k_init_lp)
    to_fetch_lp = jnp.array([[0, 3], [1, 2]], jnp.int32)   # (num_pairs, 2), per-graph local ids

    out_lp, _ = clf_lp.forward(adj, batch_num_nodes, to_fetch_lp, features)
    out_lp = jax.block_until_ready(out_lp)
    ref_lp = _ref_forward(config_lp, clf_lp.vars, True, adj, batch_num_nodes,
                          to_fetch_lp, features)
    assert out_lp.shape == (to_fetch_lp.shape[0], n_classes)
    assert jnp.allclose(out_lp, ref_lp, atol=5e-2, rtol=5e-2), \
        "link-prediction mismatch vs pure-JAX reference"

    print("KERNEL_OK")
</pallas_src>

<mosaic_0001>
module attributes {stable_mosaic.version = 11 : i64} {
  func.func @kernel(%arg0: i32, %arg1: memref<16x16xbf16, #tpu.memory_space<vmem>>, %arg2: memref<16x128xbf16, #tpu.memory_space<vmem>>, %arg3: memref<1x2x1xi32, #tpu.memory_space<vmem>>, %arg4: memref<128x128xbf16, #tpu.memory_space<vmem>>, %arg5: memref<1x128xf32, #tpu.memory_space<vmem>>, %arg6: memref<128x128xbf16, #tpu.memory_space<vmem>>, %arg7: memref<1x128xf32, #tpu.memory_space<vmem>>, %arg8: memref<128x128xbf16, #tpu.memory_space<vmem>>, %arg9: memref<1x128xf32, #tpu.memory_space<vmem>>, %arg10: memref<2x128xf32, #tpu.memory_space<vmem>>) attributes {dimension_semantics = [#tpu.dimension_semantics<arbitrary>], iteration_bounds = array<i64: 1>, scalar_prefetch = 0 : i64, scratch_operands = 0 : i64, tpu.core_type = #tpu.core_type<tc>, window_params = [{pipeline_mode = #tpu.pipeline_mode<synchronous>, transform_indices = @transform_0, window_bounds = array<i64: 16, 16>}, {pipeline_mode = #tpu.pipeline_mode<synchronous>, transform_indices = @transform_1, window_bounds = array<i64: 16, 128>}, {pipeline_mode = #tpu.pipeline_mode<synchronous>, transform_indices = @transform_2, window_bounds = array<i64: 1, 2, 1>}, {pipeline_mode = #tpu.pipeline_mode<synchronous>, transform_indices = @transform_3, window_bounds = array<i64: 128, 128>}, {pipeline_mode = #tpu.pipeline_mode<synchronous>, transform_indices = @transform_4, window_bounds = array<i64: 1, 128>}, {pipeline_mode = #tpu.pipeline_mode<synchronous>, transform_indices = @transform_5, window_bounds = array<i64: 128, 128>}, {pipeline_mode = #tpu.pipeline_mode<synchronous>, transform_indices = @transform_6, window_bounds = array<i64: 1, 128>}, {pipeline_mode = #tpu.pipeline_mode<synchronous>, transform_indices = @transform_7, window_bounds = array<i64: 128, 128>}, {pipeline_mode = #tpu.pipeline_mode<synchronous>, transform_indices = @transform_8, window_bounds = array<i64: 1, 128>}, {pipeline_mode = #tpu.pipeline_mode<synchronous>, transform_indices = @transform_9, window_bounds = array<i64: 2, 128>}]} {
    %c0 = arith.constant 0 : index
    %c0_0 = arith.constant 0 : index
    %0 = vector.load %arg1[%c0, %c0_0] : memref<16x16xbf16, #tpu.memory_space<vmem>>, vector<16x16xbf16>
    %cst = arith.constant 1.000000e+00 : bf16
    %1 = vector.broadcast %cst : bf16 to vector<16x1xbf16>
    %cst_1 = arith.constant dense<0.000000e+00> : vector<16x1xf32>
    %2 = tpu.matmul %0, %1, %cst_1 {dimension_numbers = #tpu.dot_dimension_numbers<[1], [0], [0], [1], [0, 0, 1, 1], [], []>} : vector<16x16xbf16>, vector<16x1xbf16>, vector<16x1xf32> -> vector<16x1xf32>
    %cst_2 = arith.constant 1.000000e+00 : f32
    %3 = vector.broadcast %cst_2 : f32 to vector<16x1xf32>
    %4 = arith.maximumf %2, %3 : vector<16x1xf32>
    %5 = math.rsqrt %4 : vector<16x1xf32>
    %c0_3 = arith.constant 0 : index
    %c0_4 = arith.constant 0 : index
    %6 = vector.load %arg2[%c0_3, %c0_4] : memref<16x128xbf16, #tpu.memory_space<vmem>>, vector<16x128xbf16>
    %7 = arith.extf %6 : vector<16x128xbf16> to vector<16x128xf32>
    %c0_5 = arith.constant 0 : index
    %c0_6 = arith.constant 0 : index
    %8 = vector.load %arg4[%c0_5, %c0_6] : memref<128x128xbf16, #tpu.memory_space<vmem>>, vector<128x128xbf16>
    %c0_7 = arith.constant 0 : index
    %c0_8 = arith.constant 0 : index
    %9 = vector.load %arg5[%c0_7, %c0_8] : memref<1x128xf32, #tpu.memory_space<vmem>>, vector<1x128xf32>
    %10 = vector.broadcast %5 : vector<16x1xf32> to vector<16x128xf32>
    %11 = arith.mulf %7, %10 : vector<16x128xf32>
    %12 = arith.truncf %11 : vector<16x128xf32> to vector<16x128xbf16>
    %cst_9 = arith.constant dense<0.000000e+00> : vector<16x128xf32>
    %13 = tpu.matmul %12, %8, %cst_9 {dimension_numbers = #tpu.dot_dimension_numbers<[1], [0], [0], [1], [0, 0, 1, 1], [], []>} : vector<16x128xbf16>, vector<128x128xbf16>, vector<16x128xf32> -> vector<16x128xf32>
    %14 = arith.truncf %13 : vector<16x128xf32> to vector<16x128xbf16>
    %cst_10 = arith.constant dense<0.000000e+00> : vector<16x128xf32>
    %15 = tpu.matmul %0, %14, %cst_10 {dimension_numbers = #tpu.dot_dimension_numbers<[1], [0], [0], [1], [0, 0, 1, 1], [], []>} : vector<16x16xbf16>, vector<16x128xbf16>, vector<16x128xf32> -> vector<16x128xf32>
    %16 = vector.broadcast %5 : vector<16x1xf32> to vector<16x128xf32>
    %17 = arith.mulf %15, %16 : vector<16x128xf32>
    %18 = vector.broadcast %9 : vector<1x128xf32> to vector<16x128xf32>
    %19 = arith.addf %17, %18 : vector<16x128xf32>
    %cst_11 = arith.constant 0.000000e+00 : f32
    %20 = vector.broadcast %cst_11 : f32 to vector<16x128xf32>
    %21 = arith.maximumf %19, %20 : vector<16x128xf32>
    %c0_12 = arith.constant 0 : index
    %c0_13 = arith.constant 0 : index
    %22 = vector.load %arg6[%c0_12, %c0_13] : memref<128x128xbf16, #tpu.memory_space<vmem>>, vector<128x128xbf16>
    %c0_14 = arith.constant 0 : index
    %c0_15 = arith.constant 0 : index
    %23 = vector.load %arg7[%c0_14, %c0_15] : memref<1x128xf32, #tpu.memory_space<vmem>>, vector<1x128xf32>
    %24 = vector.broadcast %5 : vector<16x1xf32> to vector<16x128xf32>
    %25 = arith.mulf %21, %24 : vector<16x128xf32>
    %26 = arith.truncf %25 : vector<16x128xf32> to vector<16x128xbf16>
    %cst_16 = arith.constant dense<0.000000e+00> : vector<16x128xf32>
    %27 = tpu.matmul %0, %26, %cst_16 {dimension_numbers = #tpu.dot_dimension_numbers<[1], [0], [0], [1], [0, 0, 1, 1], [], []>} : vector<16x16xbf16>, vector<16x128xbf16>, vector<16x128xf32> -> vector<16x128xf32>
    %28 = arith.truncf %27 : vector<16x128xf32> to vector<16x128xbf16>
    %cst_17 = arith.constant dense<0.000000e+00> : vector<16x128xf32>
    %29 = tpu.matmul %28, %22, %cst_17 {dimension_numbers = #tpu.dot_dimension_numbers<[1], [0], [0], [1], [0, 0, 1, 1], [], []>} : vector<16x128xbf16>, vector<128x128xbf16>, vector<16x128xf32> -> vector<16x128xf32>
    %30 = vector.broadcast %5 : vector<16x1xf32> to vector<16x128xf32>
    %31 = arith.mulf %29, %30 : vector<16x128xf32>
    %32 = vector.broadcast %23 : vector<1x128xf32> to vector<16x128xf32>
    %33 = arith.addf %31, %32 : vector<16x128xf32>
    %cst_18 = arith.constant 0.000000e+00 : f32
    %34 = vector.broadcast %cst_18 : f32 to vector<16x128xf32>
    %35 = arith.maximumf %33, %34 : vector<16x128xf32>
    %36 = arith.truncf %35 : vector<16x128xf32> to vector<16x128xbf16>
    %37 = tpu.iota {dimensions = array<i32: 1>} : vector<2x16xi32>
    %c0_19 = arith.constant 0 : index
    %c0_20 = arith.constant 0 : index
    %c0_21 = arith.constant 0 : index
    %38 = vector.load %arg3[%c0_19, %c0_20, %c0_21] : memref<1x2x1xi32, #tpu.memory_space<vmem>>, vector<1x2x1xi32>
    %39 = vector.shape_cast %38 : vector<1x2x1xi32> to vector<2x1xi32>
    %40 = vector.broadcast %39 : vector<2x1xi32> to vector<2x16xi32>
    %41 = arith.cmpi eq, %37, %40 : vector<2x16xi32>
    %42 = arith.extui %41 : vector<2x16xi1> to vector<2x16xi32>
    %43 = arith.sitofp %42 : vector<2x16xi32> to vector<2x16xf32>
    %44 = arith.truncf %43 : vector<2x16xf32> to vector<2x16xbf16>
    %cst_22 = arith.constant dense<0.000000e+00> : vector<2x128xf32>
    %45 = tpu.matmul %44, %36, %cst_22 {dimension_numbers = #tpu.dot_dimension_numbers<[1], [0], [0], [1], [0, 0, 1, 1], [], []>} : vector<2x16xbf16>, vector<16x128xbf16>, vector<2x128xf32> -> vector<2x128xf32>
    %c0_23 = arith.constant 0 : index
    %c0_24 = arith.constant 0 : index
    %46 = vector.load %arg8[%c0_23, %c0_24] : memref<128x128xbf16, #tpu.memory_space<vmem>>, vector<128x128xbf16>
    %c0_25 = arith.constant 0 : index
    %c0_26 = arith.constant 0 : index
    %47 = vector.load %arg9[%c0_25, %c0_26] : memref<1x128xf32, #tpu.memory_space<vmem>>, vector<1x128xf32>
    %48 = arith.truncf %45 : vector<2x128xf32> to vector<2x128xbf16>
    %cst_27 = arith.constant dense<0.000000e+00> : vector<2x128xf32>
    %49 = tpu.matmul %48, %46, %cst_27 {dimension_numbers = #tpu.dot_dimension_numbers<[1], [0], [0], [1], [0, 0, 1, 1], [], []>} : vector<2x128xbf16>, vector<128x128xbf16>, vector<2x128xf32> -> vector<2x128xf32>
    %50 = vector.broadcast %47 : vector<1x128xf32> to vector<2x128xf32>
    %51 = arith.addf %49, %50 : vector<2x128xf32>
    %c0_28 = arith.constant 0 : index
    %c0_29 = arith.constant 0 : index
    %52 = vector.load %arg10[%c0_28, %c0_29] : memref<2x128xf32, #tpu.memory_space<vmem>>, vector<2x128xf32>
    tpu.vector_store %arg10[%c0_28, %c0_29], %51 {strides = array<i32>} : memref<2x128xf32, #tpu.memory_space<vmem>>, vector<2x128xf32>,
    return
  }
  func.func @transform_0(%arg0: i32) -> (i32, i32) {
    %c0_i32 = arith.constant 0 : i32
    %c0_i32_0 = arith.constant 0 : i32
    %c0_i32_1 = arith.constant 0 : i32
    return %c0_i32, %c0_i32_0 : i32, i32
  }
  func.func @transform_1(%arg0: i32) -> (i32, i32) {
    %c0_i32 = arith.constant 0 : i32
    %c0_i32_0 = arith.constant 0 : i32
    %c0_i32_1 = arith.constant 0 : i32
    return %c0_i32, %c0_i32_0 : i32, i32
  }
  func.func @transform_2(%arg0: i32) -> (i32, i32, i32) {
    %c0_i32 = arith.constant 0 : i32
    %c0_i32_0 = arith.constant 0 : i32
    %c0_i32_1 = arith.constant 0 : i32
    %c0_i32_2 = arith.constant 0 : i32
    return %c0_i32, %c0_i32_0, %c0_i32_1 : i32, i32, i32
  }
  func.func @transform_3(%arg0: i32) -> (i32, i32) {
    %c0_i32 = arith.constant 0 : i32
    %c0_i32_0 = arith.constant 0 : i32
    %c0_i32_1 = arith.constant 0 : i32
    return %c0_i32, %c0_i32_0 : i32, i32
  }
  func.func @transform_4(%arg0: i32) -> (i32, i32) {
    %c0_i32 = arith.constant 0 : i32
    %c0_i32_0 = arith.constant 0 : i32
    %c0_i32_1 = arith.constant 0 : i32
    return %c0_i32, %c0_i32_0 : i32, i32
  }
  func.func @transform_5(%arg0: i32) -> (i32, i32) {
    %c0_i32 = arith.constant 0 : i32
    %c0_i32_0 = arith.constant 0 : i32
    %c0_i32_1 = arith.constant 0 : i32
    return %c0_i32, %c0_i32_0 : i32, i32
  }
  func.func @transform_6(%arg0: i32) -> (i32, i32) {
    %c0_i32 = arith.constant 0 : i32
    %c0_i32_0 = arith.constant 0 : i32
    %c0_i32_1 = arith.constant 0 : i32
    return %c0_i32, %c0_i32_0 : i32, i32
  }
  func.func @transform_7(%arg0: i32) -> (i32, i32) {
    %c0_i32 = arith.constant 0 : i32
    %c0_i32_0 = arith.constant 0 : i32
    %c0_i32_1 = arith.constant 0 : i32
    return %c0_i32, %c0_i32_0 : i32, i32
  }
  func.func @transform_8(%arg0: i32) -> (i32, i32) {
    %c0_i32 = arith.constant 0 : i32
    %c0_i32_0 = arith.constant 0 : i32
    %c0_i32_1 = arith.constant 0 : i32
    return %c0_i32, %c0_i32_0 : i32, i32
  }
  func.func @transform_9(%arg0: i32) -> (i32, i32) {
    %c0_i32 = arith.constant 0 : i32
    %c0_i32_0 = arith.constant 0 : i32
    %c0_i32_1 = arith.constant 0 : i32
    return %c0_i32, %c0_i32_0 : i32, i32
  }
}

module attributes {stable_mosaic.version = 11 : i64} {
  func.func @kernel(%arg0: i32, %arg1: memref<16x16xbf16, #tpu.memory_space<vmem>>, %arg2: memref<16x128xbf16, #tpu.memory_space<vmem>>, %arg3: memref<1x2x1xi32, #tpu.memory_space<vmem>>, %arg4: memref<128x128xbf16, #tpu.memory_space<vmem>>, %arg5: memref<1x128xf32, #tpu.memory_space<vmem>>, %arg6: memref<128x128xbf16, #tpu.memory_space<vmem>>, %arg7: memref<1x128xf32, #tpu.memory_space<vmem>>, %arg8: memref<128x128xbf16, #tpu.memory_space<vmem>>, %arg9: memref<1x128xf32, #tpu.memory_space<vmem>>, %arg10: memref<2x128xf32, #tpu.memory_space<vmem>>) attributes {dimension_semantics = [#tpu.dimension_semantics<arbitrary>], iteration_bounds = array<i64: 1>, scalar_prefetch = 0 : i64, scratch_operands = 0 : i64, tpu.core_type = #tpu.core_type<tc>, window_params = [{pipeline_mode = #tpu.pipeline_mode<synchronous>, transform_indices = @transform_0, window_bounds = array<i64: 16, 16>}, {pipeline_mode = #tpu.pipeline_mode<synchronous>, transform_indices = @transform_1, window_bounds = array<i64: 16, 128>}, {pipeline_mode = #tpu.pipeline_mode<synchronous>, transform_indices = @transform_2, window_bounds = array<i64: 1, 2, 1>}, {pipeline_mode = #tpu.pipeline_mode<synchronous>, transform_indices = @transform_3, window_bounds = array<i64: 128, 128>}, {pipeline_mode = #tpu.pipeline_mode<synchronous>, transform_indices = @transform_4, window_bounds = array<i64: 1, 128>}, {pipeline_mode = #tpu.pipeline_mode<synchronous>, transform_indices = @transform_5, window_bounds = array<i64: 128, 128>}, {pipeline_mode = #tpu.pipeline_mode<synchronous>, transform_indices = @transform_6, window_bounds = array<i64: 1, 128>}, {pipeline_mode = #tpu.pipeline_mode<synchronous>, transform_indices = @transform_7, window_bounds = array<i64: 128, 128>}, {pipeline_mode = #tpu.pipeline_mode<synchronous>, transform_indices = @transform_8, window_bounds = array<i64: 1, 128>}, {pipeline_mode = #tpu.pipeline_mode<synchronous>, transform_indices = @transform_9, window_bounds = array<i64: 2, 128>}]} {
    %c0 = arith.constant 0 : index
    %c0_0 = arith.constant 0 : index
    %0 = vector.load %arg1[%c0, %c0_0] : memref<16x16xbf16, #tpu.memory_space<vmem>>, vector<16x16xbf16>
    %cst = arith.constant 1.000000e+00 : bf16
    %1 = vector.broadcast %cst : bf16 to vector<16x1xbf16>
    %cst_1 = arith.constant dense<0.000000e+00> : vector<16x1xf32>
    %2 = tpu.matmul %0, %1, %cst_1 {dimension_numbers = #tpu.dot_dimension_numbers<[1], [0], [0], [1], [0, 0, 1, 1], [], []>} : vector<16x16xbf16>, vector<16x1xbf16>, vector<16x1xf32> -> vector<16x1xf32>
    %cst_2 = arith.constant 1.000000e+00 : f32
    %3 = vector.broadcast %cst_2 : f32 to vector<16x1xf32>
    %4 = arith.maximumf %2, %3 : vector<16x1xf32>
    %5 = math.rsqrt %4 : vector<16x1xf32>
    %c0_3 = arith.constant 0 : index
    %c0_4 = arith.constant 0 : index
    %6 = vector.load %arg2[%c0_3, %c0_4] : memref<16x128xbf16, #tpu.memory_space<vmem>>, vector<16x128xbf16>
    %7 = arith.extf %6 : vector<16x128xbf16> to vector<16x128xf32>
    %c0_5 = arith.constant 0 : index
    %c0_6 = arith.constant 0 : index
    %8 = vector.load %arg4[%c0_5, %c0_6] : memref<128x128xbf16, #tpu.memory_space<vmem>>, vector<128x128xbf16>
    %c0_7 = arith.constant 0 : index
    %c0_8 = arith.constant 0 : index
    %9 = vector.load %arg5[%c0_7, %c0_8] : memref<1x128xf32, #tpu.memory_space<vmem>>, vector<1x128xf32>
    %10 = vector.broadcast %5 : vector<16x1xf32> to vector<16x128xf32>
    %11 = arith.mulf %7, %10 : vector<16x128xf32>
    %12 = arith.truncf %11 : vector<16x128xf32> to vector<16x128xbf16>
    %cst_9 = arith.constant dense<0.000000e+00> : vector<16x128xf32>
    %13 = tpu.matmul %12, %8, %cst_9 {dimension_numbers = #tpu.dot_dimension_numbers<[1], [0], [0], [1], [0, 0, 1, 1], [], []>} : vector<16x128xbf16>, vector<128x128xbf16>, vector<16x128xf32> -> vector<16x128xf32>
    %14 = arith.truncf %13 : vector<16x128xf32> to vector<16x128xbf16>
    %cst_10 = arith.constant dense<0.000000e+00> : vector<16x128xf32>
    %15 = tpu.matmul %0, %14, %cst_10 {dimension_numbers = #tpu.dot_dimension_numbers<[1], [0], [0], [1], [0, 0, 1, 1], [], []>} : vector<16x16xbf16>, vector<16x128xbf16>, vector<16x128xf32> -> vector<16x128xf32>
    %16 = vector.broadcast %5 : vector<16x1xf32> to vector<16x128xf32>
    %17 = arith.mulf %15, %16 : vector<16x128xf32>
    %18 = vector.broadcast %9 : vector<1x128xf32> to vector<16x128xf32>
    %19 = arith.addf %17, %18 : vector<16x128xf32>
    %cst_11 = arith.constant 0.000000e+00 : f32
    %20 = vector.broadcast %cst_11 : f32 to vector<16x128xf32>
    %21 = arith.maximumf %19, %20 : vector<16x128xf32>
    %c0_12 = arith.constant 0 : index
    %c0_13 = arith.constant 0 : index
    %22 = vector.load %arg6[%c0_12, %c0_13] : memref<128x128xbf16, #tpu.memory_space<vmem>>, vector<128x128xbf16>
    %c0_14 = arith.constant 0 : index
    %c0_15 = arith.constant 0 : index
    %23 = vector.load %arg7[%c0_14, %c0_15] : memref<1x128xf32, #tpu.memory_space<vmem>>, vector<1x128xf32>
    %24 = vector.broadcast %5 : vector<16x1xf32> to vector<16x128xf32>
    %25 = arith.mulf %21, %24 : vector<16x128xf32>
    %26 = arith.truncf %25 : vector<16x128xf32> to vector<16x128xbf16>
    %cst_16 = arith.constant dense<0.000000e+00> : vector<16x128xf32>
    %27 = tpu.matmul %0, %26, %cst_16 {dimension_numbers = #tpu.dot_dimension_numbers<[1], [0], [0], [1], [0, 0, 1, 1], [], []>} : vector<16x16xbf16>, vector<16x128xbf16>, vector<16x128xf32> -> vector<16x128xf32>
    %28 = arith.truncf %27 : vector<16x128xf32> to vector<16x128xbf16>
    %cst_17 = arith.constant dense<0.000000e+00> : vector<16x128xf32>
    %29 = tpu.matmul %28, %22, %cst_17 {dimension_numbers = #tpu.dot_dimension_numbers<[1], [0], [0], [1], [0, 0, 1, 1], [], []>} : vector<16x128xbf16>, vector<128x128xbf16>, vector<16x128xf32> -> vector<16x128xf32>
    %30 = vector.broadcast %5 : vector<16x1xf32> to vector<16x128xf32>
    %31 = arith.mulf %29, %30 : vector<16x128xf32>
    %32 = vector.broadcast %23 : vector<1x128xf32> to vector<16x128xf32>
    %33 = arith.addf %31, %32 : vector<16x128xf32>
    %cst_18 = arith.constant 0.000000e+00 : f32
    %34 = vector.broadcast %cst_18 : f32 to vector<16x128xf32>
    %35 = arith.maximumf %33, %34 : vector<16x128xf32>
    %36 = arith.truncf %35 : vector<16x128xf32> to vector<16x128xbf16>
    %37 = tpu.iota {dimensions = array<i32: 1>} : vector<2x16xi32>
    %c0_19 = arith.constant 0 : index
    %c0_20 = arith.constant 0 : index
    %c0_21 = arith.constant 0 : index
    %38 = vector.load %arg3[%c0_19, %c0_20, %c0_21] : memref<1x2x1xi32, #tpu.memory_space<vmem>>, vector<1x2x1xi32>
    %39 = vector.shape_cast %38 : vector<1x2x1xi32> to vector<2x1xi32>
    %40 = vector.broadcast %39 : vector<2x1xi32> to vector<2x16xi32>
    %41 = arith.cmpi eq, %37, %40 : vector<2x16xi32>
    %42 = arith.extui %41 : vector<2x16xi1> to vector<2x16xi32>
    %43 = arith.sitofp %42 : vector<2x16xi32> to vector<2x16xf32>
    %44 = arith.truncf %43 : vector<2x16xf32> to vector<2x16xbf16>
    %cst_22 = arith.constant dense<0.000000e+00> : vector<2x128xf32>
    %45 = tpu.matmul %44, %36, %cst_22 {dimension_numbers = #tpu.dot_dimension_numbers<[1], [0], [0], [1], [0, 0, 1, 1], [], []>} : vector<2x16xbf16>, vector<16x128xbf16>, vector<2x128xf32> -> vector<2x128xf32>
    %c0_23 = arith.constant 0 : index
    %c0_24 = arith.constant 0 : index
    %46 = vector.load %arg8[%c0_23, %c0_24] : memref<128x128xbf16, #tpu.memory_space<vmem>>, vector<128x128xbf16>
    %c0_25 = arith.constant 0 : index
    %c0_26 = arith.constant 0 : index
    %47 = vector.load %arg9[%c0_25, %c0_26] : memref<1x128xf32, #tpu.memory_space<vmem>>, vector<1x128xf32>
    %48 = arith.truncf %45 : vector<2x128xf32> to vector<2x128xbf16>
    %cst_27 = arith.constant dense<0.000000e+00> : vector<2x128xf32>
    %49 = tpu.matmul %48, %46, %cst_27 {dimension_numbers = #tpu.dot_dimension_numbers<[1], [0], [0], [1], [0, 0, 1, 1], [], []>} : vector<2x128xbf16>, vector<128x128xbf16>, vector<2x128xf32> -> vector<2x128xf32>
    %50 = vector.broadcast %47 : vector<1x128xf32> to vector<2x128xf32>
    %51 = arith.addf %49, %50 : vector<2x128xf32>
    %c0_28 = arith.constant 0 : index
    %c0_29 = arith.constant 0 : index
    %52 = vector.load %arg10[%c0_28, %c0_29] : memref<2x128xf32, #tpu.memory_space<vmem>>, vector<2x128xf32>
    tpu.vector_store %arg10[%c0_28, %c0_29], %51 {strides = array<i32>} : memref<2x128xf32, #tpu.memory_space<vmem>>, vector<2x128xf32>,
    return
  }
  func.func @transform_0(%arg0: i32) -> (i32, i32) {
    %c0_i32 = arith.constant 0 : i32
    %c0_i32_0 = arith.constant 0 : i32
    %c0_i32_1 = arith.constant 0 : i32
    return %c0_i32, %c0_i32_0 : i32, i32
  }
  func.func @transform_1(%arg0: i32) -> (i32, i32) {
    %c0_i32 = arith.constant 0 : i32
    %c0_i32_0 = arith.constant 0 : i32
    %c0_i32_1 = arith.constant 0 : i32
    return %c0_i32, %c0_i32_0 : i32, i32
  }
  func.func @transform_2(%arg0: i32) -> (i32, i32, i32) {
    %c0_i32 = arith.constant 0 : i32
    %c0_i32_0 = arith.constant 0 : i32
    %c0_i32_1 = arith.constant 0 : i32
    %c0_i32_2 = arith.constant 0 : i32
    return %c0_i32, %c0_i32_0, %c0_i32_1 : i32, i32, i32
  }
  func.func @transform_3(%arg0: i32) -> (i32, i32) {
    %c0_i32 = arith.constant 0 : i32
    %c0_i32_0 = arith.constant 0 : i32
    %c0_i32_1 = arith.constant 0 : i32
    return %c0_i32, %c0_i32_0 : i32, i32
  }
  func.func @transform_4(%arg0: i32) -> (i32, i32) {
    %c0_i32 = arith.constant 0 : i32
    %c0_i32_0 = arith.constant 0 : i32
    %c0_i32_1 = arith.constant 0 : i32
    return %c0_i32, %c0_i32_0 : i32, i32
  }
  func.func @transform_5(%arg0: i32) -> (i32, i32) {
    %c0_i32 = arith.constant 0 : i32
    %c0_i32_0 = arith.constant 0 : i32
    %c0_i32_1 = arith.constant 0 : i32
    return %c0_i32, %c0_i32_0 : i32, i32
  }
  func.func @transform_6(%arg0: i32) -> (i32, i32) {
    %c0_i32 = arith.constant 0 : i32
    %c0_i32_0 = arith.constant 0 : i32
    %c0_i32_1 = arith.constant 0 : i32
    return %c0_i32, %c0_i32_0 : i32, i32
  }
  func.func @transform_7(%arg0: i32) -> (i32, i32) {
    %c0_i32 = arith.constant 0 : i32
    %c0_i32_0 = arith.constant 0 : i32
    %c0_i32_1 = arith.constant 0 : i32
    return %c0_i32, %c0_i32_0 : i32, i32
  }
  func.func @transform_8(%arg0: i32) -> (i32, i32) {
    %c0_i32 = arith.constant 0 : i32
    %c0_i32_0 = arith.constant 0 : i32
    %c0_i32_1 = arith.constant 0 : i32
    return %c0_i32, %c0_i32_0 : i32, i32
  }
  func.func @transform_9(%arg0: i32) -> (i32, i32) {
    %c0_i32 = arith.constant 0 : i32
    %c0_i32_0 = arith.constant 0 : i32
    %c0_i32_1 = arith.constant 0 : i32
    return %c0_i32, %c0_i32_0 : i32, i32
  }
}

</mosaic_0001>

<llo_original>
// kernel: tpu_custom_call.1
$region0: #{tpu_custom_call.1}
  #allocation0 [shape = 'u32[]', space=smem, size = 0x4, offset = 0x4, fixed_abs, tag = 'smem constant byte address 0x4 - core index']
  #allocation1 [shape = 'u32[72,128]{1,0:T(1,128)}', space=vmem, size = 0x9000, scoped, tag = 'internal scratch']
  %s0 = inlined_call_operand.hbm [shape: bf16[16,16], index: 0, kind: input, shape index: {}]
  %s1 = inlined_call_operand.hbm [shape: bf16[16,128], index: 1, kind: input, shape index: {}]
  %s2 = inlined_call_operand.vmem [shape: s32[1,2,1], index: 2, kind: input, shape index: {}]
  %s3 = inlined_call_operand.hbm [shape: bf16[128,128], index: 3, kind: input, shape index: {}]
  %s4 = inlined_call_operand.vmem [shape: f32[1,128], index: 4, kind: input, shape index: {}]
  %s5 = inlined_call_operand.hbm [shape: bf16[128,128], index: 5, kind: input, shape index: {}]
  %s6 = inlined_call_operand.vmem [shape: f32[1,128], index: 6, kind: input, shape index: {}]
  %s7 = inlined_call_operand.hbm [shape: bf16[128,128], index: 7, kind: input, shape index: {}]
  %s8 = inlined_call_operand.vmem [shape: f32[1,128], index: 8, kind: input, shape index: {}]
  %s9 = inlined_call_operand.hbm [shape: f32[2,128], index: 9, kind: output, shape index: {}]
  %s10 = sld [smem:[#allocation0]]
  $region66: #{tpu_custom_call.1} parent=0
    _
  %s12 = ssub.s32 1, %s10
  %s13 = scalar_select 0, %s12, %s10
  $region1: #{tpu_custom_call.1} parent=0
    #allocation2 [shape = 'u8[4096]{0}', space=vmem, size = 0x1000, scoped, tag = 'input window, operand 0, single buffered']
    #allocation3 [shape = 's32[1]{0}', space=sflag, size = 0x4, scoped, tag = 'scoped memory for tpu_custom_call.1']
    #allocation4 [shape = 's32[1]{0}', space=sflag, size = 0x4, scoped, tag = 'scoped memory for tpu_custom_call.1']
    #allocation5 [shape = 'u8[4096]{0}', space=vmem, size = 0x1000, scoped, tag = 'input window, operand 1, single buffered']
    #allocation6 [shape = 's32[1]{0}', space=sflag, size = 0x4, scoped, tag = 'scoped memory for tpu_custom_call.1']
    #allocation7 [shape = 'u8[32768]{0}', space=vmem, size = 0x8000, scoped, tag = 'input window, operand 3, single buffered']
    #allocation8 [shape = 'u8[32768]{0}', space=vmem, size = 0x8000, scoped, tag = 'input window, operand 5, single buffered']
    #allocation9 [shape = 's32[1]{0}', space=sflag, size = 0x4, scoped, tag = 'scoped memory for tpu_custom_call.1']
    #allocation10 [shape = 'u8[32768]{0}', space=vmem, size = 0x8000, scoped, tag = 'input window, operand 7, single buffered']
    #allocation11 [shape = 'u8[1024]{0}', space=vmem, size = 0x400, scoped, tag = 'output window, operand 0, single buffered']
    %14 = vsyncpa [#allocation3], 0
    %15 = vsyncpa [#allocation6], 0
    %16 = vsyncpa [#allocation9], 0
    %17 = vsyncpa [#allocation4], 0
    // Predicated region
    $region2: #{tpu_custom_call.1} parent=1 // pred_check
      _
    $region3: #{tpu_custom_call.1} parent=1 // pred_check_branch
      %19 = sbr.rel (0) target = $region5
    $region4: #{tpu_custom_call.1} parent=1 // pred_region
      %21 = vsyncadd [#allocation3], 0
      %s22 = sshll.u32 %s0, 4
      %s23 = int_to_ptr.hbm [resolvable:$true] %s22
      %s24 = sshll.u32 [#allocation2], 4
      %s25 = int_to_ptr.vmem [resolvable:$true] %s24
      %30 = dma.hbm_to_vmem [thread:$0]  %s23, 128, %s25, [#allocation3], 64, 64, 4
    $region5: #{tpu_custom_call.1} parent=1 // pred_fallthru
      _
    // Predicated region
    $region6: #{tpu_custom_call.1} parent=1 // pred_check
      _
    $region7: #{tpu_custom_call.1} parent=1 // pred_check_branch
      %32 = sbr.rel (0) target = $region9
    $region8: #{tpu_custom_call.1} parent=1 // pred_region
      %34 = vsyncadd [#allocation6], 0
      %s35 = sshll.u32 %s1, 4
      %s36 = int_to_ptr.hbm [resolvable:$true] %s35
      %s37 = sshll.u32 [#allocation5], 4
      %s38 = int_to_ptr.vmem [resolvable:$true] %s37
      %43 = dma.hbm_to_vmem [thread:$0]  %s36, 128, %s38, [#allocation6], 64, 64, 4
    $region9: #{tpu_custom_call.1} parent=1 // pred_fallthru
      _
    // Predicated region
    $region10: #{tpu_custom_call.1} parent=1 // pred_check
      _
    $region11: #{tpu_custom_call.1} parent=1 // pred_check_branch
      %45 = sbr.rel (0) target = $region13
    $region12: #{tpu_custom_call.1} parent=1 // pred_region
      _
    $region13: #{tpu_custom_call.1} parent=1 // pred_fallthru
      _
    // Predicated region
    $region14: #{tpu_custom_call.1} parent=1 // pred_check
      _
    $region15: #{tpu_custom_call.1} parent=1 // pred_check_branch
      %47 = sbr.rel (0) target = $region17
    $region16: #{tpu_custom_call.1} parent=1 // pred_region
      %49 = vsyncadd [#allocation6], 0
      %s50 = sshll.u32 %s3, 4
      %s51 = int_to_ptr.hbm [resolvable:$true] %s50
      %s52 = sshll.u32 [#allocation7], 4
      %s53 = int_to_ptr.vmem [resolvable:$true] %s52
      %58 = dma.hbm_to_vmem [thread:$0]  %s51, 1024, %s53, [#allocation6], 64, 64, 4
    $region17: #{tpu_custom_call.1} parent=1 // pred_fallthru
      _
    // Predicated region
    $region18: #{tpu_custom_call.1} parent=1 // pred_check
      _
    $region19: #{tpu_custom_call.1} parent=1 // pred_check_branch
      %60 = sbr.rel (0) target = $region21
    $region20: #{tpu_custom_call.1} parent=1 // pred_region
      _
    $region21: #{tpu_custom_call.1} parent=1 // pred_fallthru
      _
    // Predicated region
    $region22: #{tpu_custom_call.1} parent=1 // pred_check
      _
    $region23: #{tpu_custom_call.1} parent=1 // pred_check_branch
      %62 = sbr.rel (0) target = $region25
    $region24: #{tpu_custom_call.1} parent=1 // pred_region
      %64 = vsyncadd [#allocation9], 0
      %s65 = sshll.u32 %s5, 4
      %s66 = int_to_ptr.hbm [resolvable:$true] %s65
      %s67 = sshll.u32 [#allocation8], 4
      %s68 = int_to_ptr.vmem [resolvable:$true] %s67
      %73 = dma.hbm_to_vmem [thread:$0]  %s66, 1024, %s68, [#allocation9], 64, 64, 4
    $region25: #{tpu_custom_call.1} parent=1 // pred_fallthru
      _
    // Predicated region
    $region26: #{tpu_custom_call.1} parent=1 // pred_check
      _
    $region27: #{tpu_custom_call.1} parent=1 // pred_check_branch
      %75 = sbr.rel (0) target = $region29
    $region28: #{tpu_custom_call.1} parent=1 // pred_region
      _
    $region29: #{tpu_custom_call.1} parent=1 // pred_fallthru
      _
    // Predicated region
    $region30: #{tpu_custom_call.1} parent=1 // pred_check
      _
    $region31: #{tpu_custom_call.1} parent=1 // pred_check_branch
      %77 = sbr.rel (0) target = $region33
    $region32: #{tpu_custom_call.1} parent=1 // pred_region
      %79 = vsyncadd [#allocation9], 0
      %s80 = sshll.u32 %s7, 4
      %s81 = int_to_ptr.hbm [resolvable:$true] %s80
      %s82 = sshll.u32 [#allocation10], 4
      %s83 = int_to_ptr.vmem [resolvable:$true] %s82
      %88 = dma.hbm_to_vmem [thread:$0]  %s81, 1024, %s83, [#allocation9], 64, 64, 4
    $region33: #{tpu_custom_call.1} parent=1 // pred_fallthru
      _
    // Predicated region
    $region34: #{tpu_custom_call.1} parent=1 // pred_check
      _
    $region35: #{tpu_custom_call.1} parent=1 // pred_check_branch
      %90 = sbr.rel (0) target = $region37
    $region36: #{tpu_custom_call.1} parent=1 // pred_region
      _
    $region37: #{tpu_custom_call.1} parent=1 // pred_fallthru
      _
    // Predicated region
    $region38: #{tpu_custom_call.1} parent=1 // pred_check
      _
    $region39: #{tpu_custom_call.1} parent=1 // pred_check_branch
      %92 = sbr.rel (0) target = $region41
    $region40: #{tpu_custom_call.1} parent=1 // pred_region
      %94 = dma.done [#allocation3], 128
    $region41: #{tpu_custom_call.1} parent=1 // pred_fallthru
      _
    // Predicated region
    $region42: #{tpu_custom_call.1} parent=1 // pred_check
      _
    $region43: #{tpu_custom_call.1} parent=1 // pred_check_branch
      %96 = sbr.rel (0) target = $region45
    $region44: #{tpu_custom_call.1} parent=1 // pred_region
      %98 = dma.done [#allocation6], 128
    $region45: #{tpu_custom_call.1} parent=1 // pred_fallthru
      _
    // Predicated region
    $region46: #{tpu_custom_call.1} parent=1 // pred_check
      _
    $region47: #{tpu_custom_call.1} parent=1 // pred_check_branch
      %100 = sbr.rel (0) target = $region49
    $region48: #{tpu_custom_call.1} parent=1 // pred_region
      %102 = dma.done [#allocation6], 1024
    $region49: #{tpu_custom_call.1} parent=1 // pred_fallthru
      _
    // Predicated region
    $region50: #{tpu_custom_call.1} parent=1 // pred_check
      _
    $region51: #{tpu_custom_call.1} parent=1 // pred_check_branch
      %104 = sbr.rel (0) target = $region53
    $region52: #{tpu_custom_call.1} parent=1 // pred_region
      %106 = dma.done [#allocation9], 1024
    $region53: #{tpu_custom_call.1} parent=1 // pred_fallthru
      _
    // Predicated region
    $region54: #{tpu_custom_call.1} parent=1 // pred_check
      _
    $region55: #{tpu_custom_call.1} parent=1 // pred_check_branch
      %108 = sbr.rel (0) target = $region57
    $region56: #{tpu_custom_call.1} parent=1 // pred_region
      %110 = dma.done [#allocation9], 1024
    $region57: #{tpu_custom_call.1} parent=1 // pred_fallthru
      _
    %v113 = vld [vmem:[#allocation2] sm:$0xf]
    %v114 = vld [vmem:[#allocation2 + $0x4] sm:$0xf]
    %v117 = vunpack.c.l.b16 %v113
    %v118 = vunpack.c.l.b16 %v114
    %v119 = vpack.c.b16 %v118, %v117
    %vm120 = vcmask 130048
    %v122 = vsel %vm120, %v119, 0
    %124 = vmatpush.bf16.msra.mxu0 0
    %125 = vmatpush.bf16.msra.mxu0 0
    %126 = vmatpush.bf16.msra.mxu0 0
    %127 = vmatpush.bf16.msra.mxu0 0
    %128 = vmatpush.bf16.msra.mxu0 0
    %129 = vmatpush.bf16.msra.mxu0 0
    %130 = vmatpush.bf16.msra.mxu0 0
    %131 = vmatpush.bf16.msra.mxu0 1065369472
    %132 = vmatmul.bf16.gmra.mxu0 %v122
    %v133 = vpop.f32.mrf.mxu0
    %v134 = vadd.f32 0.0, %v133
    %v135 = vpop.f32.mrf.mxu0
    %v136 = vadd.f32 0.0, %v135
    %137 = vdwg.mxu0
    %v138 = vmax.f32 %v134, 1.0
    %v139 = vmax.f32 %v136, 1.0
    %v140 = vrsqrt.pop %v138
    %v141 = vmul.f32 %v140, %v138
    %v142 = vmul.f32 %v141, %v140
    %v143 = vmul.f32 0.5, %v142
    %v144 = vsub.f32 1.5, %v143
    %v145 = vmul.f32 %v140, %v144
    %vm146 = vweird.f32 %v138
    %vm147 = vweird.f32 %v140
    %vm148 = vmor %vm146, %vm147
    %v149 = vsel %vm148, %v140, %v145
    %v150 = vrsqrt.pop %v139
    %v151 = vmul.f32 %v150, %v139
    %v152 = vmul.f32 %v151, %v150
    %v153 = vmul.f32 0.5, %v152
    %v154 = vsub.f32 1.5, %v153
    %v155 = vmul.f32 %v150, %v154
    %vm156 = vweird.f32 %v139
    %vm157 = vweird.f32 %v150
    %vm158 = vmor %vm156, %vm157
    %v159 = vsel %vm158, %v150, %v155
    %v160 = vld [vmem:[#allocation5] sm:$0xf]
    %v161 = vld [vmem:[#allocation5 + $0x4] sm:$0xf]
    %v162 = vunpack.c.l.bf16 %v160
    %v163 = vunpack.c.l.bf16 %v161
    %v164 = vld [vmem:[#allocation7] sm:$0xf]
    %v165 = vld [vmem:[#allocation7 + $0x4] sm:$0xf]
    %v166 = vld [vmem:[#allocation7 + $0x8] sm:$0xf]
    %v167 = vld [vmem:[#allocation7 + $0xc] sm:$0xf]
    %v168 = vld [vmem:[#allocation7 + $0x10] sm:$0xf]
    %v169 = vld [vmem:[#allocation7 + $0x14] sm:$0xf]
    %v170 = vld [vmem:[#allocation7 + $0x18] sm:$0xf]
    %v171 = vld [vmem:[#allocation7 + $0x1c] sm:$0xf]
    %v172 = vld [vmem:[#allocation7 + $0x20] sm:$0xf]
    %v173 = vld [vmem:[#allocation7 + $0x24] sm:$0xf]
    %v174 = vld [vmem:[#allocation7 + $0x28] sm:$0xf]
    %v175 = vld [vmem:[#allocation7 + $0x2c] sm:$0xf]
    %v176 = vld [vmem:[#allocation7 + $0x30] sm:$0xf]
    %v177 = vld [vmem:[#allocation7 + $0x34] sm:$0xf]
    %v178 = vld [vmem:[#allocation7 + $0x38] sm:$0xf]
    %v179 = vld [vmem:[#allocation7 + $0x3c] sm:$0xf]
    %v180 = vld [vmem:[%s4] sm:$0x1]
    %182 = vset.pattern.permute.xlu0 0
    %183 = vperm.xlu0 %182, %v149
    %v184 = vpop.permute.xlu0 %183
    %187 = vset.pattern.permute.xlu0 0
    %188 = vperm.xlu0 %187, %v159
    %v189 = vpop.permute.xlu0 %188
    %v191 = vmul.f32 %v162, %v184
    %v192 = vmul.f32 %v163, %v189
    %v193 = vpack.c.bf16 %v192, %v191
    %v210 = vunpack.c.l.b16 %v164
    %v211 = vunpack.c.l.b16 %v165
    %v212 = vunpack.c.l.b16 %v166
    %v213 = vunpack.c.l.b16 %v167
    %v214 = vunpack.c.l.b16 %v168
    %v215 = vunpack.c.l.b16 %v169
    %v216 = vunpack.c.l.b16 %v170
    %v217 = vunpack.c.l.b16 %v171
    %v218 = vunpack.c.l.b16 %v172
    %v219 = vunpack.c.l.b16 %v173
    %v220 = vunpack.c.l.b16 %v174
    %v221 = vunpack.c.l.b16 %v175
    %v222 = vunpack.c.l.b16 %v176
    %v223 = vunpack.c.l.b16 %v177
    %v224 = vunpack.c.l.b16 %v178
    %v225 = vunpack.c.l.b16 %v179
    %v226 = vpack.c.b16 %v211, %v210
    %v227 = vpack.c.b16 %v213, %v212
    %v228 = vpack.c.b16 %v215, %v214
    %v229 = vpack.c.b16 %v217, %v216
    %v230 = vpack.c.b16 %v219, %v218
    %v231 = vpack.c.b16 %v221, %v220
    %v232 = vpack.c.b16 %v223, %v222
    %v233 = vpack.c.b16 %v225, %v224
    %242 = vmatpush.bf16.msra.mxu0 %v233
    %243 = vmatpush.bf16.msra.mxu0 %v232
    %244 = vmatpush.bf16.msra.mxu0 %v231
    %245 = vmatpush.bf16.msra.mxu0 %v230
    %246 = vmatpush.bf16.msra.mxu0 %v229
    %247 = vmatpush.bf16.msra.mxu0 %v228
    %248 = vmatpush.bf16.msra.mxu0 %v227
    %249 = vmatpush.bf16.msra.mxu0 %v226
    %250 = vmatmul.bf16.gmra.mxu0 %v193
    %v251 = vpop.f32.mrf.mxu0
    %v252 = vadd.f32 0.0, %v251
    %v253 = vpop.f32.mrf.mxu0
    %v254 = vadd.f32 0.0, %v253
    %255 = vdwg.mxu0
    %v256 = vpack.c.bf16 %v254, %v252
    %257 = vmatpush.bf16.msra.mxu0 0
    %258 = vmatpush.bf16.msra.mxu0 0
    %259 = vmatpush.bf16.msra.mxu0 0
    %260 = vmatpush.bf16.msra.mxu0 0
    %261 = vmatpush.bf16.msra.mxu0 0
    %262 = vmatpush.bf16.msra.mxu0 0
    %263 = vmatpush.bf16.msra.mxu0 0
    %264 = vmatpush.bf16.msra.mxu0 %v256
    %265 = vmatmul.bf16.gmra.mxu0 %v122
    %v266 = vpop.f32.mrf.mxu0
    %v267 = vadd.f32 0.0, %v266
    %v268 = vpop.f32.mrf.mxu0
    %v269 = vadd.f32 0.0, %v268
    %270 = vdwg.mxu0
    %v271 = vmul.f32 %v267, %v184
    %v272 = vmul.f32 %v269, %v189
    %v274 = vperm.slane %v180, 0
    %v276 = vadd.f32 %v271, %v274
    %v277 = vadd.f32 %v272, %v274
    %v278 = vmax.f32 %v276, 0.0
    %v279 = vmax.f32 %v277, 0.0
    %v280 = vld [vmem:[#allocation8] sm:$0xf]
    %v281 = vld [vmem:[#allocation8 + $0x4] sm:$0xf]
    %v282 = vld [vmem:[#allocation8 + $0x8] sm:$0xf]
    %v283 = vld [vmem:[#allocation8 + $0xc] sm:$0xf]
    %v284 = vld [vmem:[#allocation8 + $0x10] sm:$0xf]
    %v285 = vld [vmem:[#allocation8 + $0x14] sm:$0xf]
    %v286 = vld [vmem:[#allocation8 + $0x18] sm:$0xf]
    %v287 = vld [vmem:[#allocation8 + $0x1c] sm:$0xf]
    %v288 = vld [vmem:[#allocation8 + $0x20] sm:$0xf]
    %v289 = vld [vmem:[#allocation8 + $0x24] sm:$0xf]
    %v290 = vld [vmem:[#allocation8 + $0x28] sm:$0xf]
    %v291 = vld [vmem:[#allocation8 + $0x2c] sm:$0xf]
    %v292 = vld [vmem:[#allocation8 + $0x30] sm:$0xf]
    %v293 = vld [vmem:[#allocation8 + $0x34] sm:$0xf]
    %v294 = vld [vmem:[#allocation8 + $0x38] sm:$0xf]
    %v295 = vld [vmem:[#allocation8 + $0x3c] sm:$0xf]
    %v296 = vld [vmem:[%s6] sm:$0x1]
    %v297 = vmul.f32 %v278, %v184
    %v298 = vmul.f32 %v279, %v189
    %v299 = vpack.c.bf16 %v298, %v297
    %300 = vmatpush.bf16.msra.mxu0 0
    %301 = vmatpush.bf16.msra.mxu0 0
    %302 = vmatpush.bf16.msra.mxu0 0
    %303 = vmatpush.bf16.msra.mxu0 0
    %304 = vmatpush.bf16.msra.mxu0 0
    %305 = vmatpush.bf16.msra.mxu0 0
    %306 = vmatpush.bf16.msra.mxu0 0
    %307 = vmatpush.bf16.msra.mxu0 %v299
    %308 = vmatmul.bf16.gmra.mxu0 %v122
    %v309 = vpop.f32.mrf.mxu0
    %v310 = vadd.f32 0.0, %v309
    %v311 = vpop.f32.mrf.mxu0
    %v312 = vadd.f32 0.0, %v311
    %313 = vdwg.mxu0
    %v314 = vpack.c.bf16 %v312, %v310
    %v331 = vunpack.c.l.b16 %v280
    %v332 = vunpack.c.l.b16 %v281
    %v333 = vunpack.c.l.b16 %v282
    %v334 = vunpack.c.l.b16 %v283
    %v335 = vunpack.c.l.b16 %v284
    %v336 = vunpack.c.l.b16 %v285
    %v337 = vunpack.c.l.b16 %v286
    %v338 = vunpack.c.l.b16 %v287
    %v339 = vunpack.c.l.b16 %v288
    %v340 = vunpack.c.l.b16 %v289
    %v341 = vunpack.c.l.b16 %v290
    %v342 = vunpack.c.l.b16 %v291
    %v343 = vunpack.c.l.b16 %v292
    %v344 = vunpack.c.l.b16 %v293
    %v345 = vunpack.c.l.b16 %v294
    %v346 = vunpack.c.l.b16 %v295
    %v347 = vpack.c.b16 %v332, %v331
    %v348 = vpack.c.b16 %v334, %v333
    %v349 = vpack.c.b16 %v336, %v335
    %v350 = vpack.c.b16 %v338, %v337
    %v351 = vpack.c.b16 %v340, %v339
    %v352 = vpack.c.b16 %v342, %v341
    %v353 = vpack.c.b16 %v344, %v343
    %v354 = vpack.c.b16 %v346, %v345
    %363 = vmatpush.bf16.msra.mxu0 %v354
    %364 = vmatpush.bf16.msra.mxu0 %v353
    %365 = vmatpush.bf16.msra.mxu0 %v352
    %366 = vmatpush.bf16.msra.mxu0 %v351
    %367 = vmatpush.bf16.msra.mxu0 %v350
    %368 = vmatpush.bf16.msra.mxu0 %v349
    %369 = vmatpush.bf16.msra.mxu0 %v348
    %370 = vmatpush.bf16.msra.mxu0 %v347
    %371 = vmatmul.bf16.gmra.mxu0 %v314
    %v372 = vpop.f32.mrf.mxu0
    %v373 = vadd.f32 0.0, %v372
    %v374 = vpop.f32.mrf.mxu0
    %v375 = vadd.f32 0.0, %v374
    %376 = vdwg.mxu0
    %v377 = vmul.f32 %v373, %v184
    %v378 = vmul.f32 %v375, %v189
    %v380 = vperm.slane %v296, 0
    %v382 = vadd.f32 %v377, %v380
    %v383 = vadd.f32 %v378, %v380
    %v384 = vmax.f32 %v382, 0.0
    %v385 = vmax.f32 %v383, 0.0
    %v386 = vpack.c.bf16 %v385, %v384
    %v387 = vlaneseq
    %v388 = vand.u32 %v387, 127
    %v389 = vld [vmem:[%s2] sm:$0x3]
    %390 = vset.pattern.permute.xlu0 0
    %391 = vperm.xlu0 %390, %v389
    %v392 = vpop.permute.xlu0 %391
    %vm393 = vcmp.eq.s32.totalorder %v388, %v392
    %v394 = vsel %vm393, 1, 0
    %v395 = vcvt.s32.f32 %v394
    %v396 = vpack.c.bf16 %v395, %v395
    %v398 = vsel %vm120, %v396, 0
    %400 = vmatpush.bf16.msra.mxu0 0
    %401 = vmatpush.bf16.msra.mxu0 0
    %402 = vmatpush.bf16.msra.mxu0 0
    %403 = vmatpush.bf16.msra.mxu0 0
    %404 = vmatpush.bf16.msra.mxu0 0
    %405 = vmatpush.bf16.msra.mxu0 0
    %406 = vmatpush.bf16.msra.mxu0 0
    %407 = vmatpush.bf16.msra.mxu0 %v386
    %408 = vmatmul.bf16.gmra.mxu0 %v398
    %v409 = vpop.f32.mrf.mxu0
    %v410 = vadd.f32 0.0, %v409
    %v411 = vpop.f32.mrf.mxu0
    %412 = vdwg.mxu0
    %v413 = vld [vmem:[#allocation10] sm:$0xf]
    %v414 = vld [vmem:[#allocation10 + $0x4] sm:$0xf]
    %v415 = vld [vmem:[#allocation10 + $0x8] sm:$0xf]
    %v416 = vld [vmem:[#allocation10 + $0xc] sm:$0xf]
    %v417 = vld [vmem:[#allocation10 + $0x10] sm:$0xf]
    %v418 = vld [vmem:[#allocation10 + $0x14] sm:$0xf]
    %v419 = vld [vmem:[#allocation10 + $0x18] sm:$0xf]
    %v420 = vld [vmem:[#allocation10 + $0x1c] sm:$0xf]
    %v421 = vld [vmem:[#allocation10 + $0x20] sm:$0xf]
    %v422 = vld [vmem:[#allocation10 + $0x24] sm:$0xf]
    %v423 = vld [vmem:[#allocation10 + $0x28] sm:$0xf]
    %v424 = vld [vmem:[#allocation10 + $0x2c] sm:$0xf]
    %v425 = vld [vmem:[#allocation10 + $0x30] sm:$0xf]
    %v426 = vld [vmem:[#allocation10 + $0x34] sm:$0xf]
    %v427 = vld [vmem:[#allocation10 + $0x38] sm:$0xf]
    %v428 = vld [vmem:[#allocation10 + $0x3c] sm:$0xf]
    %v429 = vld [vmem:[%s8] sm:$0x1]
    %v430 = vpack.c.bf16 %v410, %v410
    %v432 = vperm.slane %v429, 0
    %v450 = vunpack.c.l.b16 %v413
    %v451 = vunpack.c.l.b16 %v414
    %v452 = vunpack.c.l.b16 %v415
    %v453 = vunpack.c.l.b16 %v416
    %v454 = vunpack.c.l.b16 %v417
    %v455 = vunpack.c.l.b16 %v418
    %v456 = vunpack.c.l.b16 %v419
    %v457 = vunpack.c.l.b16 %v420
    %v458 = vunpack.c.l.b16 %v421
    %v459 = vunpack.c.l.b16 %v422
    %v460 = vunpack.c.l.b16 %v423
    %v461 = vunpack.c.l.b16 %v424
    %v462 = vunpack.c.l.b16 %v425
    %v463 = vunpack.c.l.b16 %v426
    %v464 = vunpack.c.l.b16 %v427
    %v465 = vunpack.c.l.b16 %v428
    %v466 = vpack.c.b16 %v451, %v450
    %v467 = vpack.c.b16 %v453, %v452
    %v468 = vpack.c.b16 %v455, %v454
    %v469 = vpack.c.b16 %v457, %v456
    %v470 = vpack.c.b16 %v459, %v458
    %v471 = vpack.c.b16 %v461, %v460
    %v472 = vpack.c.b16 %v463, %v462
    %v473 = vpack.c.b16 %v465, %v464
    %482 = vmatpush.bf16.msra.mxu0 %v473
    %483 = vmatpush.bf16.msra.mxu0 %v472
    %484 = vmatpush.bf16.msra.mxu0 %v471
    %485 = vmatpush.bf16.msra.mxu0 %v470
    %486 = vmatpush.bf16.msra.mxu0 %v469
    %487 = vmatpush.bf16.msra.mxu0 %v468
    %488 = vmatpush.bf16.msra.mxu0 %v467
    %489 = vmatpush.bf16.msra.mxu0 %v466
    %490 = vmatmul.bf16.gmra.mxu0 %v430
    %v491 = vpop.f32.mrf.mxu0
    %v492 = vadd.f32 %v432, %v491
    %v493 = vpop.f32.mrf.mxu0
    %494 = vdwg.mxu0
    %495 = vst [vmem:[#allocation11] sm:$0x3] %v492
    // Predicated region
    $region58: #{tpu_custom_call.1} parent=1 // pred_check
      _
    $region59: #{tpu_custom_call.1} parent=1 // pred_check_branch
      %497 = sbr.rel (0) target = $region61
    $region60: #{tpu_custom_call.1} parent=1 // pred_region
      %499 = vsyncadd [#allocation4], 0
      %s501 = sshll.u32 [#allocation11], 4
      %s502 = int_to_ptr.vmem [resolvable:$true] %s501
      %s503 = sshll.u32 %s9, 4
      %s504 = int_to_ptr.hbm [resolvable:$true] %s503
      %506 = dma.vmem_to_hbm [thread:$0]  %s502, 32, %s504, [#allocation4]
    $region61: #{tpu_custom_call.1} parent=1 // pred_fallthru
      _
    // Predicated region
    $region62: #{tpu_custom_call.1} parent=1 // pred_check
      _
    $region63: #{tpu_custom_call.1} parent=1 // pred_check_branch
      %508 = sbr.rel (0) target = $region65
    $region64: #{tpu_custom_call.1} parent=1 // pred_region
      %510 = dma.done [#allocation4], 32
    $region65: #{tpu_custom_call.1} parent=1 // pred_fallthru
      _
    %511 = vsyncpa [#allocation3], 1
    %512 = vsyncpa [#allocation6], 1
    %513 = vsyncpa [#allocation9], 1
    %514 = vsyncpa [#allocation4], 1

// kernel: tpu_custom_call.1
$region0: #{tpu_custom_call.1}
  #allocation0 [shape = 'u32[]', space=smem, size = 0x4, offset = 0x4, fixed_abs, tag = 'smem constant byte address 0x4 - core index']
  #allocation1 [shape = 'u32[72,128]{1,0:T(1,128)}', space=vmem, size = 0x9000, scoped, tag = 'internal scratch']
  %s0 = inlined_call_operand.hbm [shape: bf16[16,16], index: 0, kind: input, shape index: {}]
  %s1 = inlined_call_operand.hbm [shape: bf16[16,128], index: 1, kind: input, shape index: {}]
  %s2 = inlined_call_operand.vmem [shape: s32[1,2,1], index: 2, kind: input, shape index: {}]
  %s3 = inlined_call_operand.hbm [shape: bf16[128,128], index: 3, kind: input, shape index: {}]
  %s4 = inlined_call_operand.vmem [shape: f32[1,128], index: 4, kind: input, shape index: {}]
  %s5 = inlined_call_operand.hbm [shape: bf16[128,128], index: 5, kind: input, shape index: {}]
  %s6 = inlined_call_operand.vmem [shape: f32[1,128], index: 6, kind: input, shape index: {}]
  %s7 = inlined_call_operand.hbm [shape: bf16[128,128], index: 7, kind: input, shape index: {}]
  %s8 = inlined_call_operand.vmem [shape: f32[1,128], index: 8, kind: input, shape index: {}]
  %s9 = inlined_call_operand.hbm [shape: f32[2,128], index: 9, kind: output, shape index: {}]
  %s10 = sld [smem:[#allocation0]]
  $region66: #{tpu_custom_call.1} parent=0
    _
  %s12 = ssub.s32 1, %s10
  %s13 = scalar_select 0, %s12, %s10
  $region1: #{tpu_custom_call.1} parent=0
    #allocation2 [shape = 'u8[4096]{0}', space=vmem, size = 0x1000, scoped, tag = 'input window, operand 0, single buffered']
    #allocation3 [shape = 's32[1]{0}', space=sflag, size = 0x4, scoped, tag = 'scoped memory for tpu_custom_call.1']
    #allocation4 [shape = 's32[1]{0}', space=sflag, size = 0x4, scoped, tag = 'scoped memory for tpu_custom_call.1']
    #allocation5 [shape = 'u8[4096]{0}', space=vmem, size = 0x1000, scoped, tag = 'input window, operand 1, single buffered']
    #allocation6 [shape = 's32[1]{0}', space=sflag, size = 0x4, scoped, tag = 'scoped memory for tpu_custom_call.1']
    #allocation7 [shape = 'u8[32768]{0}', space=vmem, size = 0x8000, scoped, tag = 'input window, operand 3, single buffered']
    #allocation8 [shape = 'u8[32768]{0}', space=vmem, size = 0x8000, scoped, tag = 'input window, operand 5, single buffered']
    #allocation9 [shape = 's32[1]{0}', space=sflag, size = 0x4, scoped, tag = 'scoped memory for tpu_custom_call.1']
    #allocation10 [shape = 'u8[32768]{0}', space=vmem, size = 0x8000, scoped, tag = 'input window, operand 7, single buffered']
    #allocation11 [shape = 'u8[1024]{0}', space=vmem, size = 0x400, scoped, tag = 'output window, operand 0, single buffered']
    %14 = vsyncpa [#allocation3], 0
    %15 = vsyncpa [#allocation6], 0
    %16 = vsyncpa [#allocation9], 0
    %17 = vsyncpa [#allocation4], 0
    // Predicated region
    $region2: #{tpu_custom_call.1} parent=1 // pred_check
      _
    $region3: #{tpu_custom_call.1} parent=1 // pred_check_branch
      %19 = sbr.rel (0) target = $region5
    $region4: #{tpu_custom_call.1} parent=1 // pred_region
      %21 = vsyncadd [#allocation3], 0
      %s22 = sshll.u32 %s0, 4
      %s23 = int_to_ptr.hbm [resolvable:$true] %s22
      %s24 = sshll.u32 [#allocation2], 4
      %s25 = int_to_ptr.vmem [resolvable:$true] %s24
      %30 = dma.hbm_to_vmem [thread:$0]  %s23, 128, %s25, [#allocation3], 64, 64, 4
    $region5: #{tpu_custom_call.1} parent=1 // pred_fallthru
      _
    // Predicated region
    $region6: #{tpu_custom_call.1} parent=1 // pred_check
      _
    $region7: #{tpu_custom_call.1} parent=1 // pred_check_branch
      %32 = sbr.rel (0) target = $region9
    $region8: #{tpu_custom_call.1} parent=1 // pred_region
      %34 = vsyncadd [#allocation6], 0
      %s35 = sshll.u32 %s1, 4
      %s36 = int_to_ptr.hbm [resolvable:$true] %s35
      %s37 = sshll.u32 [#allocation5], 4
      %s38 = int_to_ptr.vmem [resolvable:$true] %s37
      %43 = dma.hbm_to_vmem [thread:$0]  %s36, 128, %s38, [#allocation6], 64, 64, 4
    $region9: #{tpu_custom_call.1} parent=1 // pred_fallthru
      _
    // Predicated region
    $region10: #{tpu_custom_call.1} parent=1 // pred_check
      _
    $region11: #{tpu_custom_call.1} parent=1 // pred_check_branch
      %45 = sbr.rel (0) target = $region13
    $region12: #{tpu_custom_call.1} parent=1 // pred_region
      _
    $region13: #{tpu_custom_call.1} parent=1 // pred_fallthru
      _
    // Predicated region
    $region14: #{tpu_custom_call.1} parent=1 // pred_check
      _
    $region15: #{tpu_custom_call.1} parent=1 // pred_check_branch
      %47 = sbr.rel (0) target = $region17
    $region16: #{tpu_custom_call.1} parent=1 // pred_region
      %49 = vsyncadd [#allocation6], 0
      %s50 = sshll.u32 %s3, 4
      %s51 = int_to_ptr.hbm [resolvable:$true] %s50
      %s52 = sshll.u32 [#allocation7], 4
      %s53 = int_to_ptr.vmem [resolvable:$true] %s52
      %58 = dma.hbm_to_vmem [thread:$0]  %s51, 1024, %s53, [#allocation6], 64, 64, 4
    $region17: #{tpu_custom_call.1} parent=1 // pred_fallthru
      _
    // Predicated region
    $region18: #{tpu_custom_call.1} parent=1 // pred_check
      _
    $region19: #{tpu_custom_call.1} parent=1 // pred_check_branch
      %60 = sbr.rel (0) target = $region21
    $region20: #{tpu_custom_call.1} parent=1 // pred_region
      _
    $region21: #{tpu_custom_call.1} parent=1 // pred_fallthru
      _
    // Predicated region
    $region22: #{tpu_custom_call.1} parent=1 // pred_check
      _
    $region23: #{tpu_custom_call.1} parent=1 // pred_check_branch
      %62 = sbr.rel (0) target = $region25
    $region24: #{tpu_custom_call.1} parent=1 // pred_region
      %64 = vsyncadd [#allocation9], 0
      %s65 = sshll.u32 %s5, 4
      %s66 = int_to_ptr.hbm [resolvable:$true] %s65
      %s67 = sshll.u32 [#allocation8], 4
      %s68 = int_to_ptr.vmem [resolvable:$true] %s67
      %73 = dma.hbm_to_vmem [thread:$0]  %s66, 1024, %s68, [#allocation9], 64, 64, 4
    $region25: #{tpu_custom_call.1} parent=1 // pred_fallthru
      _
    // Predicated region
    $region26: #{tpu_custom_call.1} parent=1 // pred_check
      _
    $region27: #{tpu_custom_call.1} parent=1 // pred_check_branch
      %75 = sbr.rel (0) target = $region29
    $region28: #{tpu_custom_call.1} parent=1 // pred_region
      _
    $region29: #{tpu_custom_call.1} parent=1 // pred_fallthru
      _
    // Predicated region
    $region30: #{tpu_custom_call.1} parent=1 // pred_check
      _
    $region31: #{tpu_custom_call.1} parent=1 // pred_check_branch
      %77 = sbr.rel (0) target = $region33
    $region32: #{tpu_custom_call.1} parent=1 // pred_region
      %79 = vsyncadd [#allocation9], 0
      %s80 = sshll.u32 %s7, 4
      %s81 = int_to_ptr.hbm [resolvable:$true] %s80
      %s82 = sshll.u32 [#allocation10], 4
      %s83 = int_to_ptr.vmem [resolvable:$true] %s82
      %88 = dma.hbm_to_vmem [thread:$0]  %s81, 1024, %s83, [#allocation9], 64, 64, 4
    $region33: #{tpu_custom_call.1} parent=1 // pred_fallthru
      _
    // Predicated region
    $region34: #{tpu_custom_call.1} parent=1 // pred_check
      _
    $region35: #{tpu_custom_call.1} parent=1 // pred_check_branch
      %90 = sbr.rel (0) target = $region37
    $region36: #{tpu_custom_call.1} parent=1 // pred_region
      _
    $region37: #{tpu_custom_call.1} parent=1 // pred_fallthru
      _
    // Predicated region
    $region38: #{tpu_custom_call.1} parent=1 // pred_check
      _
    $region39: #{tpu_custom_call.1} parent=1 // pred_check_branch
      %92 = sbr.rel (0) target = $region41
    $region40: #{tpu_custom_call.1} parent=1 // pred_region
      %94 = dma.done [#allocation3], 128
    $region41: #{tpu_custom_call.1} parent=1 // pred_fallthru
      _
    // Predicated region
    $region42: #{tpu_custom_call.1} parent=1 // pred_check
      _
    $region43: #{tpu_custom_call.1} parent=1 // pred_check_branch
      %96 = sbr.rel (0) target = $region45
    $region44: #{tpu_custom_call.1} parent=1 // pred_region
      %98 = dma.done [#allocation6], 128
    $region45: #{tpu_custom_call.1} parent=1 // pred_fallthru
      _
    // Predicated region
    $region46: #{tpu_custom_call.1} parent=1 // pred_check
      _
    $region47: #{tpu_custom_call.1} parent=1 // pred_check_branch
      %100 = sbr.rel (0) target = $region49
    $region48: #{tpu_custom_call.1} parent=1 // pred_region
      %102 = dma.done [#allocation6], 1024
    $region49: #{tpu_custom_call.1} parent=1 // pred_fallthru
      _
    // Predicated region
    $region50: #{tpu_custom_call.1} parent=1 // pred_check
      _
    $region51: #{tpu_custom_call.1} parent=1 // pred_check_branch
      %104 = sbr.rel (0) target = $region53
    $region52: #{tpu_custom_call.1} parent=1 // pred_region
      %106 = dma.done [#allocation9], 1024
    $region53: #{tpu_custom_call.1} parent=1 // pred_fallthru
      _
    // Predicated region
    $region54: #{tpu_custom_call.1} parent=1 // pred_check
      _
    $region55: #{tpu_custom_call.1} parent=1 // pred_check_branch
      %108 = sbr.rel (0) target = $region57
    $region56: #{tpu_custom_call.1} parent=1 // pred_region
      %110 = dma.done [#allocation9], 1024
    $region57: #{tpu_custom_call.1} parent=1 // pred_fallthru
      _
    %v113 = vld [vmem:[#allocation2] sm:$0xf]
    %v114 = vld [vmem:[#allocation2 + $0x4] sm:$0xf]
    %v117 = vunpack.c.l.b16 %v113
    %v118 = vunpack.c.l.b16 %v114
    %v119 = vpack.c.b16 %v118, %v117
    %vm120 = vcmask 130048
    %v122 = vsel %vm120, %v119, 0
    %124 = vmatpush.bf16.msra.mxu0 0
    %125 = vmatpush.bf16.msra.mxu0 0
    %126 = vmatpush.bf16.msra.mxu0 0
    %127 = vmatpush.bf16.msra.mxu0 0
    %128 = vmatpush.bf16.msra.mxu0 0
    %129 = vmatpush.bf16.msra.mxu0 0
    %130 = vmatpush.bf16.msra.mxu0 0
    %131 = vmatpush.bf16.msra.mxu0 1065369472
    %132 = vmatmul.bf16.gmra.mxu0 %v122
    %v133 = vpop.f32.mrf.mxu0
    %v134 = vadd.f32 0.0, %v133
    %v135 = vpop.f32.mrf.mxu0
    %v136 = vadd.f32 0.0, %v135
    %137 = vdwg.mxu0
    %v138 = vmax.f32 %v134, 1.0
    %v139 = vmax.f32 %v136, 1.0
    %v140 = vrsqrt.pop %v138
    %v141 = vmul.f32 %v140, %v138
    %v142 = vmul.f32 %v141, %v140
    %v143 = vmul.f32 0.5, %v142
    %v144 = vsub.f32 1.5, %v143
    %v145 = vmul.f32 %v140, %v144
    %vm146 = vweird.f32 %v138
    %vm147 = vweird.f32 %v140
    %vm148 = vmor %vm146, %vm147
    %v149 = vsel %vm148, %v140, %v145
    %v150 = vrsqrt.pop %v139
    %v151 = vmul.f32 %v150, %v139
    %v152 = vmul.f32 %v151, %v150
    %v153 = vmul.f32 0.5, %v152
    %v154 = vsub.f32 1.5, %v153
    %v155 = vmul.f32 %v150, %v154
    %vm156 = vweird.f32 %v139
    %vm157 = vweird.f32 %v150
    %vm158 = vmor %vm156, %vm157
    %v159 = vsel %vm158, %v150, %v155
    %v160 = vld [vmem:[#allocation5] sm:$0xf]
    %v161 = vld [vmem:[#allocation5 + $0x4] sm:$0xf]
    %v162 = vunpack.c.l.bf16 %v160
    %v163 = vunpack.c.l.bf16 %v161
    %v164 = vld [vmem:[#allocation7] sm:$0xf]
    %v165 = vld [vmem:[#allocation7 + $0x4] sm:$0xf]
    %v166 = vld [vmem:[#allocation7 + $0x8] sm:$0xf]
    %v167 = vld [vmem:[#allocation7 + $0xc] sm:$0xf]
    %v168 = vld [vmem:[#allocation7 + $0x10] sm:$0xf]
    %v169 = vld [vmem:[#allocation7 + $0x14] sm:$0xf]
    %v170 = vld [vmem:[#allocation7 + $0x18] sm:$0xf]
    %v171 = vld [vmem:[#allocation7 + $0x1c] sm:$0xf]
    %v172 = vld [vmem:[#allocation7 + $0x20] sm:$0xf]
    %v173 = vld [vmem:[#allocation7 + $0x24] sm:$0xf]
    %v174 = vld [vmem:[#allocation7 + $0x28] sm:$0xf]
    %v175 = vld [vmem:[#allocation7 + $0x2c] sm:$0xf]
    %v176 = vld [vmem:[#allocation7 + $0x30] sm:$0xf]
    %v177 = vld [vmem:[#allocation7 + $0x34] sm:$0xf]
    %v178 = vld [vmem:[#allocation7 + $0x38] sm:$0xf]
    %v179 = vld [vmem:[#allocation7 + $0x3c] sm:$0xf]
    %v180 = vld [vmem:[%s4] sm:$0x1]
    %182 = vset.pattern.permute.xlu0 0
    %183 = vperm.xlu0 %182, %v149
    %v184 = vpop.permute.xlu0 %183
    %187 = vset.pattern.permute.xlu0 0
    %188 = vperm.xlu0 %187, %v159
    %v189 = vpop.permute.xlu0 %188
    %v191 = vmul.f32 %v162, %v184
    %v192 = vmul.f32 %v163, %v189
    %v193 = vpack.c.bf16 %v192, %v191
    %v210 = vunpack.c.l.b16 %v164
    %v211 = vunpack.c.l.b16 %v165
    %v212 = vunpack.c.l.b16 %v166
    %v213 = vunpack.c.l.b16 %v167
    %v214 = vunpack.c.l.b16 %v168
    %v215 = vunpack.c.l.b16 %v169
    %v216 = vunpack.c.l.b16 %v170
    %v217 = vunpack.c.l.b16 %v171
    %v218 = vunpack.c.l.b16 %v172
    %v219 = vunpack.c.l.b16 %v173
    %v220 = vunpack.c.l.b16 %v174
    %v221 = vunpack.c.l.b16 %v175
    %v222 = vunpack.c.l.b16 %v176
    %v223 = vunpack.c.l.b16 %v177
    %v224 = vunpack.c.l.b16 %v178
    %v225 = vunpack.c.l.b16 %v179
    %v226 = vpack.c.b16 %v211, %v210
    %v227 = vpack.c.b16 %v213, %v212
    %v228 = vpack.c.b16 %v215, %v214
    %v229 = vpack.c.b16 %v217, %v216
    %v230 = vpack.c.b16 %v219, %v218
    %v231 = vpack.c.b16 %v221, %v220
    %v232 = vpack.c.b16 %v223, %v222
    %v233 = vpack.c.b16 %v225, %v224
    %242 = vmatpush.bf16.msra.mxu0 %v233
    %243 = vmatpush.bf16.msra.mxu0 %v232
    %244 = vmatpush.bf16.msra.mxu0 %v231
    %245 = vmatpush.bf16.msra.mxu0 %v230
    %246 = vmatpush.bf16.msra.mxu0 %v229
    %247 = vmatpush.bf16.msra.mxu0 %v228
    %248 = vmatpush.bf16.msra.mxu0 %v227
    %249 = vmatpush.bf16.msra.mxu0 %v226
    %250 = vmatmul.bf16.gmra.mxu0 %v193
    %v251 = vpop.f32.mrf.mxu0
    %v252 = vadd.f32 0.0, %v251
    %v253 = vpop.f32.mrf.mxu0
    %v254 = vadd.f32 0.0, %v253
    %255 = vdwg.mxu0
    %v256 = vpack.c.bf16 %v254, %v252
    %257 = vmatpush.bf16.msra.mxu0 0
    %258 = vmatpush.bf16.msra.mxu0 0
    %259 = vmatpush.bf16.msra.mxu0 0
    %260 = vmatpush.bf16.msra.mxu0 0
    %261 = vmatpush.bf16.msra.mxu0 0
    %262 = vmatpush.bf16.msra.mxu0 0
    %263 = vmatpush.bf16.msra.mxu0 0
    %264 = vmatpush.bf16.msra.mxu0 %v256
    %265 = vmatmul.bf16.gmra.mxu0 %v122
    %v266 = vpop.f32.mrf.mxu0
    %v267 = vadd.f32 0.0, %v266
    %v268 = vpop.f32.mrf.mxu0
    %v269 = vadd.f32 0.0, %v268
    %270 = vdwg.mxu0
    %v271 = vmul.f32 %v267, %v184
    %v272 = vmul.f32 %v269, %v189
    %v274 = vperm.slane %v180, 0
    %v276 = vadd.f32 %v271, %v274
    %v277 = vadd.f32 %v272, %v274
    %v278 = vmax.f32 %v276, 0.0
    %v279 = vmax.f32 %v277, 0.0
    %v280 = vld [vmem:[#allocation8] sm:$0xf]
    %v281 = vld [vmem:[#allocation8 + $0x4] sm:$0xf]
    %v282 = vld [vmem:[#allocation8 + $0x8] sm:$0xf]
    %v283 = vld [vmem:[#allocation8 + $0xc] sm:$0xf]
    %v284 = vld [vmem:[#allocation8 + $0x10] sm:$0xf]
    %v285 = vld [vmem:[#allocation8 + $0x14] sm:$0xf]
    %v286 = vld [vmem:[#allocation8 + $0x18] sm:$0xf]
    %v287 = vld [vmem:[#allocation8 + $0x1c] sm:$0xf]
    %v288 = vld [vmem:[#allocation8 + $0x20] sm:$0xf]
    %v289 = vld [vmem:[#allocation8 + $0x24] sm:$0xf]
    %v290 = vld [vmem:[#allocation8 + $0x28] sm:$0xf]
    %v291 = vld [vmem:[#allocation8 + $0x2c] sm:$0xf]
    %v292 = vld [vmem:[#allocation8 + $0x30] sm:$0xf]
    %v293 = vld [vmem:[#allocation8 + $0x34] sm:$0xf]
    %v294 = vld [vmem:[#allocation8 + $0x38] sm:$0xf]
    %v295 = vld [vmem:[#allocation8 + $0x3c] sm:$0xf]
    %v296 = vld [vmem:[%s6] sm:$0x1]
    %v297 = vmul.f32 %v278, %v184
    %v298 = vmul.f32 %v279, %v189
    %v299 = vpack.c.bf16 %v298, %v297
    %300 = vmatpush.bf16.msra.mxu0 0
    %301 = vmatpush.bf16.msra.mxu0 0
    %302 = vmatpush.bf16.msra.mxu0 0
    %303 = vmatpush.bf16.msra.mxu0 0
    %304 = vmatpush.bf16.msra.mxu0 0
    %305 = vmatpush.bf16.msra.mxu0 0
    %306 = vmatpush.bf16.msra.mxu0 0
    %307 = vmatpush.bf16.msra.mxu0 %v299
    %308 = vmatmul.bf16.gmra.mxu0 %v122
    %v309 = vpop.f32.mrf.mxu0
    %v310 = vadd.f32 0.0, %v309
    %v311 = vpop.f32.mrf.mxu0
    %v312 = vadd.f32 0.0, %v311
    %313 = vdwg.mxu0
    %v314 = vpack.c.bf16 %v312, %v310
    %v331 = vunpack.c.l.b16 %v280
    %v332 = vunpack.c.l.b16 %v281
    %v333 = vunpack.c.l.b16 %v282
    %v334 = vunpack.c.l.b16 %v283
    %v335 = vunpack.c.l.b16 %v284
    %v336 = vunpack.c.l.b16 %v285
    %v337 = vunpack.c.l.b16 %v286
    %v338 = vunpack.c.l.b16 %v287
    %v339 = vunpack.c.l.b16 %v288
    %v340 = vunpack.c.l.b16 %v289
    %v341 = vunpack.c.l.b16 %v290
    %v342 = vunpack.c.l.b16 %v291
    %v343 = vunpack.c.l.b16 %v292
    %v344 = vunpack.c.l.b16 %v293
    %v345 = vunpack.c.l.b16 %v294
    %v346 = vunpack.c.l.b16 %v295
    %v347 = vpack.c.b16 %v332, %v331
    %v348 = vpack.c.b16 %v334, %v333
    %v349 = vpack.c.b16 %v336, %v335
    %v350 = vpack.c.b16 %v338, %v337
    %v351 = vpack.c.b16 %v340, %v339
    %v352 = vpack.c.b16 %v342, %v341
    %v353 = vpack.c.b16 %v344, %v343
    %v354 = vpack.c.b16 %v346, %v345
    %363 = vmatpush.bf16.msra.mxu0 %v354
    %364 = vmatpush.bf16.msra.mxu0 %v353
    %365 = vmatpush.bf16.msra.mxu0 %v352
    %366 = vmatpush.bf16.msra.mxu0 %v351
    %367 = vmatpush.bf16.msra.mxu0 %v350
    %368 = vmatpush.bf16.msra.mxu0 %v349
    %369 = vmatpush.bf16.msra.mxu0 %v348
    %370 = vmatpush.bf16.msra.mxu0 %v347
    %371 = vmatmul.bf16.gmra.mxu0 %v314
    %v372 = vpop.f32.mrf.mxu0
    %v373 = vadd.f32 0.0, %v372
    %v374 = vpop.f32.mrf.mxu0
    %v375 = vadd.f32 0.0, %v374
    %376 = vdwg.mxu0
    %v377 = vmul.f32 %v373, %v184
    %v378 = vmul.f32 %v375, %v189
    %v380 = vperm.slane %v296, 0
    %v382 = vadd.f32 %v377, %v380
    %v383 = vadd.f32 %v378, %v380
    %v384 = vmax.f32 %v382, 0.0
    %v385 = vmax.f32 %v383, 0.0
    %v386 = vpack.c.bf16 %v385, %v384
    %v387 = vlaneseq
    %v388 = vand.u32 %v387, 127
    %v389 = vld [vmem:[%s2] sm:$0x3]
    %390 = vset.pattern.permute.xlu0 0
    %391 = vperm.xlu0 %390, %v389
    %v392 = vpop.permute.xlu0 %391
    %vm393 = vcmp.eq.s32.totalorder %v388, %v392
    %v394 = vsel %vm393, 1, 0
    %v395 = vcvt.s32.f32 %v394
    %v396 = vpack.c.bf16 %v395, %v395
    %v398 = vsel %vm120, %v396, 0
    %400 = vmatpush.bf16.msra.mxu0 0
    %401 = vmatpush.bf16.msra.mxu0 0
    %402 = vmatpush.bf16.msra.mxu0 0
    %403 = vmatpush.bf16.msra.mxu0 0
    %404 = vmatpush.bf16.msra.mxu0 0
    %405 = vmatpush.bf16.msra.mxu0 0
    %406 = vmatpush.bf16.msra.mxu0 0
    %407 = vmatpush.bf16.msra.mxu0 %v386
    %408 = vmatmul.bf16.gmra.mxu0 %v398
    %v409 = vpop.f32.mrf.mxu0
    %v410 = vadd.f32 0.0, %v409
    %v411 = vpop.f32.mrf.mxu0
    %412 = vdwg.mxu0
    %v413 = vld [vmem:[#allocation10] sm:$0xf]
    %v414 = vld [vmem:[#allocation10 + $0x4] sm:$0xf]
    %v415 = vld [vmem:[#allocation10 + $0x8] sm:$0xf]
    %v416 = vld [vmem:[#allocation10 + $0xc] sm:$0xf]
    %v417 = vld [vmem:[#allocation10 + $0x10] sm:$0xf]
    %v418 = vld [vmem:[#allocation10 + $0x14] sm:$0xf]
    %v419 = vld [vmem:[#allocation10 + $0x18] sm:$0xf]
    %v420 = vld [vmem:[#allocation10 + $0x1c] sm:$0xf]
    %v421 = vld [vmem:[#allocation10 + $0x20] sm:$0xf]
    %v422 = vld [vmem:[#allocation10 + $0x24] sm:$0xf]
    %v423 = vld [vmem:[#allocation10 + $0x28] sm:$0xf]
    %v424 = vld [vmem:[#allocation10 + $0x2c] sm:$0xf]
    %v425 = vld [vmem:[#allocation10 + $0x30] sm:$0xf]
    %v426 = vld [vmem:[#allocation10 + $0x34] sm:$0xf]
    %v427 = vld [vmem:[#allocation10 + $0x38] sm:$0xf]
    %v428 = vld [vmem:[#allocation10 + $0x3c] sm:$0xf]
    %v429 = vld [vmem:[%s8] sm:$0x1]
    %v430 = vpack.c.bf16 %v410, %v410
    %v432 = vperm.slane %v429, 0
    %v450 = vunpack.c.l.b16 %v413
    %v451 = vunpack.c.l.b16 %v414
    %v452 = vunpack.c.l.b16 %v415
    %v453 = vunpack.c.l.b16 %v416
    %v454 = vunpack.c.l.b16 %v417
    %v455 = vunpack.c.l.b16 %v418
    %v456 = vunpack.c.l.b16 %v419
    %v457 = vunpack.c.l.b16 %v420
    %v458 = vunpack.c.l.b16 %v421
    %v459 = vunpack.c.l.b16 %v422
    %v460 = vunpack.c.l.b16 %v423
    %v461 = vunpack.c.l.b16 %v424
    %v462 = vunpack.c.l.b16 %v425
    %v463 = vunpack.c.l.b16 %v426
    %v464 = vunpack.c.l.b16 %v427
    %v465 = vunpack.c.l.b16 %v428
    %v466 = vpack.c.b16 %v451, %v450
    %v467 = vpack.c.b16 %v453, %v452
    %v468 = vpack.c.b16 %v455, %v454
    %v469 = vpack.c.b16 %v457, %v456
    %v470 = vpack.c.b16 %v459, %v458
    %v471 = vpack.c.b16 %v461, %v460
    %v472 = vpack.c.b16 %v463, %v462
    %v473 = vpack.c.b16 %v465, %v464
    %482 = vmatpush.bf16.msra.mxu0 %v473
    %483 = vmatpush.bf16.msra.mxu0 %v472
    %484 = vmatpush.bf16.msra.mxu0 %v471
    %485 = vmatpush.bf16.msra.mxu0 %v470
    %486 = vmatpush.bf16.msra.mxu0 %v469
    %487 = vmatpush.bf16.msra.mxu0 %v468
    %488 = vmatpush.bf16.msra.mxu0 %v467
    %489 = vmatpush.bf16.msra.mxu0 %v466
    %490 = vmatmul.bf16.gmra.mxu0 %v430
    %v491 = vpop.f32.mrf.mxu0
    %v492 = vadd.f32 %v432, %v491
    %v493 = vpop.f32.mrf.mxu0
    %494 = vdwg.mxu0
    %495 = vst [vmem:[#allocation11] sm:$0x3] %v492
    // Predicated region
    $region58: #{tpu_custom_call.1} parent=1 // pred_check
      _
    $region59: #{tpu_custom_call.1} parent=1 // pred_check_branch
      %497 = sbr.rel (0) target = $region61
    $region60: #{tpu_custom_call.1} parent=1 // pred_region
      %499 = vsyncadd [#allocation4], 0
      %s501 = sshll.u32 [#allocation11], 4
      %s502 = int_to_ptr.vmem [resolvable:$true] %s501
      %s503 = sshll.u32 %s9, 4
      %s504 = int_to_ptr.hbm [resolvable:$true] %s503
      %506 = dma.vmem_to_hbm [thread:$0]  %s502, 32, %s504, [#allocation4]
    $region61: #{tpu_custom_call.1} parent=1 // pred_fallthru
      _
    // Predicated region
    $region62: #{tpu_custom_call.1} parent=1 // pred_check
      _
    $region63: #{tpu_custom_call.1} parent=1 // pred_check_branch
      %508 = sbr.rel (0) target = $region65
    $region64: #{tpu_custom_call.1} parent=1 // pred_region
      %510 = dma.done [#allocation4], 32
    $region65: #{tpu_custom_call.1} parent=1 // pred_fallthru
      _
    %511 = vsyncpa [#allocation3], 1
    %512 = vsyncpa [#allocation6], 1
    %513 = vsyncpa [#allocation9], 1
    %514 = vsyncpa [#allocation4], 1

</llo_original>
